<compile_context>
chip_gen: v6e
topology: v6e:2x2x1
jax: 0.10.0
libtpu: 0.0.40
codegen_flags: <defaults>
</compile_context>

<pallas_src>
import jax
import jax.numpy as jnp
from jax.experimental import pallas as pl
from jax.experimental.pallas import tpu as pltpu


def _round_up(v, m):
    return ((v + m - 1) // m) * m


# --------------------------------------------------------------------------
# Fused kernel: per time-chunk input projection + unrolled GRU recurrence.
# Hidden state is resident in a VMEM scratch across the whole (sequential)
# grid; within a chunk it stays in registers.
# --------------------------------------------------------------------------
def gru_fused_kernel(x_ref, wih_ref, whh_ref, bih_ref, bhhn_ref,
                     out_ref, h_scr):
    c = pl.program_id(0)
    t_blk, bp, ip = x_ref.shape
    hp = h_scr.shape[-1]

    @pl.when(c == 0)
    def _():
        h_scr[...] = jnp.zeros_like(h_scr)                      # h0 = 0

    # ---- input projection for the whole chunk: one fat MXU matmul --------
    x2 = x_ref[...].reshape(t_blk * bp, ip)
    gi_all = jnp.dot(x2, wih_ref[...], preferred_element_type=jnp.float32)
    gi_all = (gi_all + bih_ref[...]).reshape(t_blk, bp, 3 * hp)

    whh = whh_ref[...]                                          # (Hp, 3*Hp)
    bhh_n = bhhn_ref[...]                                       # (1, Hp)

    # ---- sequential recurrence inside the chunk (statically unrolled) ----
    h = h_scr[...]                                              # (Bp, Hp) f32
    for t in range(t_blk):
        gi = gi_all[t]                                          # (Bp, 3*Hp)
        gh = jnp.dot(h.astype(whh.dtype), whh,
                     preferred_element_type=jnp.float32)
        # PyTorch gate order [r; z; n]; slices are 128-lane aligned.
        r = jax.nn.sigmoid(gi[:, 0 * hp:1 * hp] + gh[:, 0 * hp:1 * hp])
        z = jax.nn.sigmoid(gi[:, 1 * hp:2 * hp] + gh[:, 1 * hp:2 * hp])
        n = jnp.tanh(gi[:, 2 * hp:3 * hp] + r * (gh[:, 2 * hp:3 * hp] + bhh_n))
        h = n + z * (h - n)                                     # (1-z)*n + z*h
        out_ref[t] = h
    h_scr[...] = h


# --------------------------------------------------------------------------
# Wrapper: pads / re-lays-out PyTorch-style GRU parameters, calls the kernel.
# --------------------------------------------------------------------------
def gru_forward(x, w_ih, w_hh, b_ih, b_hh, *, t_blk=16,
                mxu_dtype=jnp.float32):
    """x: (T, B, I).  w_ih: (3H, I), w_hh: (3H, H), b_*: (3H,) (PyTorch layout).
    Returns (out (T, B, H), hidden (1, B, H)) like nn.GRU."""
    T, B, I = x.shape
    H = w_hh.shape[1]
    assert w_ih.shape == (3 * H, I)
    assert w_hh.shape == (3 * H, H)

    Bp = _round_up(B, 8)          # sublane-aligned batch
    Hp = _round_up(H, 128)        # lane-dense hidden (gate slices 128-aligned)
    Ip = _round_up(I, 8)          # only sublane-pad the input feature dim
    t_blk = max(1, min(t_blk, T))
    Tp = _round_up(T, t_blk)

    def pack_w(w, in_dim, in_pad):
        # (3H, in_dim) gate-stacked -> (in_pad, 3*Hp): per-gate transpose,
        # zero-pad, concat along lanes.
        gates = jnp.split(w.astype(jnp.float32), 3, axis=0)
        cols = [jnp.pad(g.T, ((0, in_pad - in_dim), (0, Hp - H))) for g in gates]
        return jnp.concatenate(cols, axis=1).astype(mxu_dtype)

    wih_t = pack_w(w_ih, I, Ip)   # (Ip, 3*Hp)
    whh_t = pack_w(w_hh, H, Hp)   # (Hp, 3*Hp)

    # Fold b_hh of the r/z gates into b_ih; keep the n-gate b_hh separate.
    bi = jnp.split(b_ih.astype(jnp.float32), 3)
    bh = jnp.split(b_hh.astype(jnp.float32), 3)
    fused = [bi[0] + bh[0], bi[1] + bh[1], bi[2]]
    bih_f = jnp.concatenate(
        [jnp.pad(g, (0, Hp - H)) for g in fused]).reshape(1, 3 * Hp)
    bhh_n = jnp.pad(bh[2], (0, Hp - H)).reshape(1, Hp)

    x_p = jnp.pad(x.astype(jnp.float32),
                  ((0, Tp - T), (0, Bp - B), (0, Ip - I))).astype(mxu_dtype)

    out_p = pl.pallas_call(
        gru_fused_kernel,
        out_shape=jax.ShapeDtypeStruct((Tp, Bp, Hp), jnp.float32),
        grid=(Tp // t_blk,),
        in_specs=[
            pl.BlockSpec((t_blk, Bp, Ip), lambda c: (c, 0, 0)),
            pl.BlockSpec((Ip, 3 * Hp), lambda c: (0, 0)),   # constant block ->
            pl.BlockSpec((Hp, 3 * Hp), lambda c: (0, 0)),   # fetched once
            pl.BlockSpec((1, 3 * Hp), lambda c: (0, 0)),
            pl.BlockSpec((1, Hp), lambda c: (0, 0)),
        ],
        out_specs=pl.BlockSpec((t_blk, Bp, Hp), lambda c: (c, 0, 0)),
        scratch_shapes=[pltpu.VMEM((Bp, Hp), jnp.float32)],
        compiler_params=pltpu.CompilerParams(
            dimension_semantics=("arbitrary",),          # sequential over time
            vmem_limit_bytes=48 * 1024 * 1024),
    )(x_p, wih_t, whh_t, bih_f, bhh_n)

    out = out_p[:T, :B, :H]
    hidden = out[T - 1:T]                                 # (1, B, H), h0-layer
    return out, hidden


# --------------------------------------------------------------------------
# Pure-JAX reference (PyTorch nn.GRU semantics) for a correctness check.
# --------------------------------------------------------------------------
def gru_reference(x, w_ih, w_hh, b_ih, b_hh):
    T, B, I = x.shape
    H = w_hh.shape[1]
    w_ih_t = w_ih.T.astype(jnp.float32)
    w_hh_t = w_hh.T.astype(jnp.float32)
    hi = jax.lax.Precision.HIGHEST

    def step(h, x_t):
        gi = jnp.dot(x_t, w_ih_t, precision=hi) + b_ih
        gh = jnp.dot(h, w_hh_t, precision=hi) + b_hh
        r = jax.nn.sigmoid(gi[:, :H] + gh[:, :H])
        z = jax.nn.sigmoid(gi[:, H:2 * H] + gh[:, H:2 * H])
        n = jnp.tanh(gi[:, 2 * H:] + r * gh[:, 2 * H:])
        h_new = (1.0 - z) * n + z * h
        return h_new, h_new

    h0 = jnp.zeros((B, H), jnp.float32)
    h_last, out = jax.lax.scan(step, h0, x.astype(jnp.float32))
    return out, h_last[None]


if __name__ == "__main__":
    key = jax.random.PRNGKey(0)
    T, B, I, H = 8, 2, 4, 32          # seq=8, batch=2, input_dim=4, hidden=32

    ks = jax.random.split(key, 5)
    x = jax.random.normal(ks[0], (T, B, I), jnp.float32)
    s = 1.0 / (H ** 0.5)
    w_ih = jax.random.uniform(ks[1], (3 * H, I), jnp.float32, -s, s)
    w_hh = jax.random.uniform(ks[2], (3 * H, H), jnp.float32, -s, s)
    b_ih = jax.random.uniform(ks[3], (3 * H,), jnp.float32, -s, s)
    b_hh = jax.random.uniform(ks[4], (3 * H,), jnp.float32, -s, s)

    out, hidden = gru_forward(x, w_ih, w_hh, b_ih, b_hh)
    out = jax.block_until_ready(out)
    hidden = jax.block_until_ready(hidden)

    out_ref, hidden_ref = gru_reference(x, w_ih, w_hh, b_ih, b_hh)
    out_ref = jax.block_until_ready(out_ref)

    assert out.shape == (T, B, H), out.shape
    assert hidden.shape == (1, B, H), hidden.shape
    assert jnp.allclose(out, out_ref, atol=1e-3, rtol=1e-3), \
        f"out max abs err {jnp.max(jnp.abs(out - out_ref))}"
    assert jnp.allclose(hidden, hidden_ref, atol=1e-3, rtol=1e-3), \
        f"hidden max abs err {jnp.max(jnp.abs(hidden - hidden_ref))}"

    print("KERNEL_OK")
</pallas_src>

<mosaic_0001>
module attributes {stable_mosaic.version = 11 : i64} {
  func.func @gru_fused_kernel(%arg0: i32, %arg1: memref<8x8x8xf32, #tpu.memory_space<vmem>>, %arg2: memref<8x384xf32, #tpu.memory_space<vmem>>, %arg3: memref<128x384xf32, #tpu.memory_space<vmem>>, %arg4: memref<1x384xf32, #tpu.memory_space<vmem>>, %arg5: memref<1x128xf32, #tpu.memory_space<vmem>>, %arg6: memref<8x8x128xf32, #tpu.memory_space<vmem>>, %arg7: memref<8x128xf32, #tpu.memory_space<vmem>>) attributes {dimension_semantics = [#tpu.dimension_semantics<arbitrary>], iteration_bounds = array<i64: 1>, scalar_prefetch = 0 : i64, scratch_operands = 1 : i64, tpu.core_type = #tpu.core_type<tc>, window_params = [{transform_indices = @transform_0, window_bounds = array<i64: 8, 8, 8>}, {pipeline_mode = #tpu.pipeline_mode<synchronous>, transform_indices = @transform_1, window_bounds = array<i64: 8, 384>}, {pipeline_mode = #tpu.pipeline_mode<synchronous>, transform_indices = @transform_2, window_bounds = array<i64: 128, 384>}, {pipeline_mode = #tpu.pipeline_mode<synchronous>, transform_indices = @transform_3, window_bounds = array<i64: 1, 384>}, {pipeline_mode = #tpu.pipeline_mode<synchronous>, transform_indices = @transform_4, window_bounds = array<i64: 1, 128>}, {transform_indices = @transform_5, window_bounds = array<i64: 8, 8, 128>}]} {
    %c0_i32 = arith.constant 0 : i32
    %0 = arith.cmpi eq, %arg0, %c0_i32 : i32
    %1 = arith.extui %0 : i1 to i32
    %c0_i32_0 = arith.constant 0 : i32
    %2 = arith.cmpi ne, %1, %c0_i32_0 : i32
    scf.if %2 {
      %cst_56 = arith.constant 0.000000e+00 : f32
      %271 = vector.broadcast %cst_56 : f32 to vector<8x128xf32>
      %c0_57 = arith.constant 0 : index
      %c0_58 = arith.constant 0 : index
      %272 = vector.load %arg7[%c0_57, %c0_58] : memref<8x128xf32, #tpu.memory_space<vmem>>, vector<8x128xf32>
      tpu.vector_store %arg7[%c0_57, %c0_58], %271 {strides = array<i32>} : memref<8x128xf32, #tpu.memory_space<vmem>>, vector<8x128xf32>,
    } else {
    }
    %c0 = arith.constant 0 : index
    %c0_1 = arith.constant 0 : index
    %c0_2 = arith.constant 0 : index
    %3 = vector.load %arg1[%c0, %c0_1, %c0_2] : memref<8x8x8xf32, #tpu.memory_space<vmem>>, vector<8x8x8xf32>
    %4 = vector.shape_cast %3 : vector<8x8x8xf32> to vector<64x8xf32>
    %c0_3 = arith.constant 0 : index
    %c0_4 = arith.constant 0 : index
    %5 = vector.load %arg2[%c0_3, %c0_4] : memref<8x384xf32, #tpu.memory_space<vmem>>, vector<8x384xf32>
    %cst = arith.constant dense<0.000000e+00> : vector<64x384xf32>
    %6 = tpu.matmul %4, %5, %cst {dimension_numbers = #tpu.dot_dimension_numbers<[1], [0], [0], [1], [0, 0, 1, 1], [], []>} : vector<64x8xf32>, vector<8x384xf32>, vector<64x384xf32> -> vector<64x384xf32>
    %c0_5 = arith.constant 0 : index
    %c0_6 = arith.constant 0 : index
    %7 = vector.load %arg4[%c0_5, %c0_6] : memref<1x384xf32, #tpu.memory_space<vmem>>, vector<1x384xf32>
    %8 = vector.broadcast %7 : vector<1x384xf32> to vector<64x384xf32>
    %9 = arith.addf %6, %8 : vector<64x384xf32>
    %10 = vector.shape_cast %9 : vector<64x384xf32> to vector<8x8x384xf32>
    %c0_7 = arith.constant 0 : index
    %c0_8 = arith.constant 0 : index
    %11 = vector.load %arg3[%c0_7, %c0_8] : memref<128x384xf32, #tpu.memory_space<vmem>>, vector<128x384xf32>
    %c0_9 = arith.constant 0 : index
    %c0_10 = arith.constant 0 : index
    %12 = vector.load %arg5[%c0_9, %c0_10] : memref<1x128xf32, #tpu.memory_space<vmem>>, vector<1x128xf32>
    %c0_11 = arith.constant 0 : index
    %c0_12 = arith.constant 0 : index
    %13 = vector.load %arg7[%c0_11, %c0_12] : memref<8x128xf32, #tpu.memory_space<vmem>>, vector<8x128xf32>
    %14 = vector.extract_strided_slice %10 {offsets = [0, 0, 0], sizes = [1, 8, 384], strides = [1, 1, 1]} : vector<8x8x384xf32> to vector<1x8x384xf32>
    %15 = vector.shape_cast %14 : vector<1x8x384xf32> to vector<8x384xf32>
    %cst_13 = arith.constant dense<0.000000e+00> : vector<8x384xf32>
    %16 = tpu.matmul %13, %11, %cst_13 {dimension_numbers = #tpu.dot_dimension_numbers<[1], [0], [0], [1], [0, 0, 1, 1], [], []>} : vector<8x128xf32>, vector<128x384xf32>, vector<8x384xf32> -> vector<8x384xf32>
    %17 = vector.extract_strided_slice %15 {offsets = [0, 0], sizes = [8, 128], strides = [1, 1]} : vector<8x384xf32> to vector<8x128xf32>
    %18 = vector.extract_strided_slice %16 {offsets = [0, 0], sizes = [8, 128], strides = [1, 1]} : vector<8x384xf32> to vector<8x128xf32>
    %19 = arith.addf %17, %18 : vector<8x128xf32>
    %20 = arith.negf %19 : vector<8x128xf32>
    %21 = math.exp %20 : vector<8x128xf32>
    %cst_14 = arith.constant 1.000000e+00 : f32
    %22 = vector.broadcast %cst_14 : f32 to vector<8x128xf32>
    %23 = arith.addf %22, %21 : vector<8x128xf32>
    %24 = arith.divf %22, %23 : vector<8x128xf32>
    %25 = vector.extract_strided_slice %15 {offsets = [0, 128], sizes = [8, 128], strides = [1, 1]} : vector<8x384xf32> to vector<8x128xf32>
    %26 = vector.extract_strided_slice %16 {offsets = [0, 128], sizes = [8, 128], strides = [1, 1]} : vector<8x384xf32> to vector<8x128xf32>
    %27 = arith.addf %25, %26 : vector<8x128xf32>
    %28 = arith.negf %27 : vector<8x128xf32>
    %29 = math.exp %28 : vector<8x128xf32>
    %cst_15 = arith.constant 1.000000e+00 : f32
    %30 = vector.broadcast %cst_15 : f32 to vector<8x128xf32>
    %31 = arith.addf %30, %29 : vector<8x128xf32>
    %32 = arith.divf %30, %31 : vector<8x128xf32>
    %33 = vector.extract_strided_slice %15 {offsets = [0, 256], sizes = [8, 128], strides = [1, 1]} : vector<8x384xf32> to vector<8x128xf32>
    %34 = vector.extract_strided_slice %16 {offsets = [0, 256], sizes = [8, 128], strides = [1, 1]} : vector<8x384xf32> to vector<8x128xf32>
    %35 = vector.broadcast %12 : vector<1x128xf32> to vector<8x128xf32>
    %36 = arith.addf %34, %35 : vector<8x128xf32>
    %37 = arith.mulf %24, %36 : vector<8x128xf32>
    %38 = arith.addf %33, %37 : vector<8x128xf32>
    %39 = math.tanh %38 : vector<8x128xf32>
    %40 = arith.subf %13, %39 : vector<8x128xf32>
    %41 = arith.mulf %32, %40 : vector<8x128xf32>
    %42 = arith.addf %39, %41 : vector<8x128xf32>
    %c0_16 = arith.constant 0 : index
    %c0_17 = arith.constant 0 : index
    %c0_18 = arith.constant 0 : index
    %43 = vector.load %arg6[%c0_16, %c0_17, %c0_18] : memref<8x8x128xf32, #tpu.memory_space<vmem>>, vector<1x8x128xf32>
    %44 = vector.shape_cast %43 : vector<1x8x128xf32> to vector<8x128xf32>
    %45 = vector.shape_cast %42 : vector<8x128xf32> to vector<1x8x128xf32>
    tpu.vector_store %arg6[%c0_16, %c0_17, %c0_18], %45 {strides = array<i32>} : memref<8x8x128xf32, #tpu.memory_space<vmem>>, vector<1x8x128xf32>,
    %46 = vector.extract_strided_slice %10 {offsets = [1, 0, 0], sizes = [1, 8, 384], strides = [1, 1, 1]} : vector<8x8x384xf32> to vector<1x8x384xf32>
    %47 = vector.shape_cast %46 : vector<1x8x384xf32> to vector<8x384xf32>
    %cst_19 = arith.constant dense<0.000000e+00> : vector<8x384xf32>
    %48 = tpu.matmul %42, %11, %cst_19 {dimension_numbers = #tpu.dot_dimension_numbers<[1], [0], [0], [1], [0, 0, 1, 1], [], []>} : vector<8x128xf32>, vector<128x384xf32>, vector<8x384xf32> -> vector<8x384xf32>
    %49 = vector.extract_strided_slice %47 {offsets = [0, 0], sizes = [8, 128], strides = [1, 1]} : vector<8x384xf32> to vector<8x128xf32>
    %50 = vector.extract_strided_slice %48 {offsets = [0, 0], sizes = [8, 128], strides = [1, 1]} : vector<8x384xf32> to vector<8x128xf32>
    %51 = arith.addf %49, %50 : vector<8x128xf32>
    %52 = arith.negf %51 : vector<8x128xf32>
    %53 = math.exp %52 : vector<8x128xf32>
    %cst_20 = arith.constant 1.000000e+00 : f32
    %54 = vector.broadcast %cst_20 : f32 to vector<8x128xf32>
    %55 = arith.addf %54, %53 : vector<8x128xf32>
    %56 = arith.divf %54, %55 : vector<8x128xf32>
    %57 = vector.extract_strided_slice %47 {offsets = [0, 128], sizes = [8, 128], strides = [1, 1]} : vector<8x384xf32> to vector<8x128xf32>
    %58 = vector.extract_strided_slice %48 {offsets = [0, 128], sizes = [8, 128], strides = [1, 1]} : vector<8x384xf32> to vector<8x128xf32>
    %59 = arith.addf %57, %58 : vector<8x128xf32>
    %60 = arith.negf %59 : vector<8x128xf32>
    %61 = math.exp %60 : vector<8x128xf32>
    %cst_21 = arith.constant 1.000000e+00 : f32
    %62 = vector.broadcast %cst_21 : f32 to vector<8x128xf32>
    %63 = arith.addf %62, %61 : vector<8x128xf32>
    %64 = arith.divf %62, %63 : vector<8x128xf32>
    %65 = vector.extract_strided_slice %47 {offsets = [0, 256], sizes = [8, 128], strides = [1, 1]} : vector<8x384xf32> to vector<8x128xf32>
    %66 = vector.extract_strided_slice %48 {offsets = [0, 256], sizes = [8, 128], strides = [1, 1]} : vector<8x384xf32> to vector<8x128xf32>
    %67 = vector.broadcast %12 : vector<1x128xf32> to vector<8x128xf32>
    %68 = arith.addf %66, %67 : vector<8x128xf32>
    %69 = arith.mulf %56, %68 : vector<8x128xf32>
    %70 = arith.addf %65, %69 : vector<8x128xf32>
    %71 = math.tanh %70 : vector<8x128xf32>
    %72 = arith.subf %42, %71 : vector<8x128xf32>
    %73 = arith.mulf %64, %72 : vector<8x128xf32>
    %74 = arith.addf %71, %73 : vector<8x128xf32>
    %c1 = arith.constant 1 : index
    %c0_22 = arith.constant 0 : index
    %c0_23 = arith.constant 0 : index
    %75 = vector.load %arg6[%c1, %c0_22, %c0_23] : memref<8x8x128xf32, #tpu.memory_space<vmem>>, vector<1x8x128xf32>
    %76 = vector.shape_cast %75 : vector<1x8x128xf32> to vector<8x128xf32>
    %77 = vector.shape_cast %74 : vector<8x128xf32> to vector<1x8x128xf32>
    tpu.vector_store %arg6[%c1, %c0_22, %c0_23], %77 {strides = array<i32>} : memref<8x8x128xf32, #tpu.memory_space<vmem>>, vector<1x8x128xf32>,
    %78 = vector.extract_strided_slice %10 {offsets = [2, 0, 0], sizes = [1, 8, 384], strides = [1, 1, 1]} : vector<8x8x384xf32> to vector<1x8x384xf32>
    %79 = vector.shape_cast %78 : vector<1x8x384xf32> to vector<8x384xf32>
    %cst_24 = arith.constant dense<0.000000e+00> : vector<8x384xf32>
    %80 = tpu.matmul %74, %11, %cst_24 {dimension_numbers = #tpu.dot_dimension_numbers<[1], [0], [0], [1], [0, 0, 1, 1], [], []>} : vector<8x128xf32>, vector<128x384xf32>, vector<8x384xf32> -> vector<8x384xf32>
    %81 = vector.extract_strided_slice %79 {offsets = [0, 0], sizes = [8, 128], strides = [1, 1]} : vector<8x384xf32> to vector<8x128xf32>
    %82 = vector.extract_strided_slice %80 {offsets = [0, 0], sizes = [8, 128], strides = [1, 1]} : vector<8x384xf32> to vector<8x128xf32>
    %83 = arith.addf %81, %82 : vector<8x128xf32>
    %84 = arith.negf %83 : vector<8x128xf32>
    %85 = math.exp %84 : vector<8x128xf32>
    %cst_25 = arith.constant 1.000000e+00 : f32
    %86 = vector.broadcast %cst_25 : f32 to vector<8x128xf32>
    %87 = arith.addf %86, %85 : vector<8x128xf32>
    %88 = arith.divf %86, %87 : vector<8x128xf32>
    %89 = vector.extract_strided_slice %79 {offsets = [0, 128], sizes = [8, 128], strides = [1, 1]} : vector<8x384xf32> to vector<8x128xf32>
    %90 = vector.extract_strided_slice %80 {offsets = [0, 128], sizes = [8, 128], strides = [1, 1]} : vector<8x384xf32> to vector<8x128xf32>
    %91 = arith.addf %89, %90 : vector<8x128xf32>
    %92 = arith.negf %91 : vector<8x128xf32>
    %93 = math.exp %92 : vector<8x128xf32>
    %cst_26 = arith.constant 1.000000e+00 : f32
    %94 = vector.broadcast %cst_26 : f32 to vector<8x128xf32>
    %95 = arith.addf %94, %93 : vector<8x128xf32>
    %96 = arith.divf %94, %95 : vector<8x128xf32>
    %97 = vector.extract_strided_slice %79 {offsets = [0, 256], sizes = [8, 128], strides = [1, 1]} : vector<8x384xf32> to vector<8x128xf32>
    %98 = vector.extract_strided_slice %80 {offsets = [0, 256], sizes = [8, 128], strides = [1, 1]} : vector<8x384xf32> to vector<8x128xf32>
    %99 = vector.broadcast %12 : vector<1x128xf32> to vector<8x128xf32>
    %100 = arith.addf %98, %99 : vector<8x128xf32>
    %101 = arith.mulf %88, %100 : vector<8x128xf32>
    %102 = arith.addf %97, %101 : vector<8x128xf32>
    %103 = math.tanh %102 : vector<8x128xf32>
    %104 = arith.subf %74, %103 : vector<8x128xf32>
    %105 = arith.mulf %96, %104 : vector<8x128xf32>
    %106 = arith.addf %103, %105 : vector<8x128xf32>
    %c2 = arith.constant 2 : index
    %c0_27 = arith.constant 0 : index
    %c0_28 = arith.constant 0 : index
    %107 = vector.load %arg6[%c2, %c0_27, %c0_28] : memref<8x8x128xf32, #tpu.memory_space<vmem>>, vector<1x8x128xf32>
    %108 = vector.shape_cast %107 : vector<1x8x128xf32> to vector<8x128xf32>
    %109 = vector.shape_cast %106 : vector<8x128xf32> to vector<1x8x128xf32>
    tpu.vector_store %arg6[%c2, %c0_27, %c0_28], %109 {strides = array<i32>} : memref<8x8x128xf32, #tpu.memory_space<vmem>>, vector<1x8x128xf32>,
    %110 = vector.extract_strided_slice %10 {offsets = [3, 0, 0], sizes = [1, 8, 384], strides = [1, 1, 1]} : vector<8x8x384xf32> to vector<1x8x384xf32>
    %111 = vector.shape_cast %110 : vector<1x8x384xf32> to vector<8x384xf32>
    %cst_29 = arith.constant dense<0.000000e+00> : vector<8x384xf32>
    %112 = tpu.matmul %106, %11, %cst_29 {dimension_numbers = #tpu.dot_dimension_numbers<[1], [0], [0], [1], [0, 0, 1, 1], [], []>} : vector<8x128xf32>, vector<128x384xf32>, vector<8x384xf32> -> vector<8x384xf32>
    %113 = vector.extract_strided_slice %111 {offsets = [0, 0], sizes = [8, 128], strides = [1, 1]} : vector<8x384xf32> to vector<8x128xf32>
    %114 = vector.extract_strided_slice %112 {offsets = [0, 0], sizes = [8, 128], strides = [1, 1]} : vector<8x384xf32> to vector<8x128xf32>
    %115 = arith.addf %113, %114 : vector<8x128xf32>
    %116 = arith.negf %115 : vector<8x128xf32>
    %117 = math.exp %116 : vector<8x128xf32>
    %cst_30 = arith.constant 1.000000e+00 : f32
    %118 = vector.broadcast %cst_30 : f32 to vector<8x128xf32>
    %119 = arith.addf %118, %117 : vector<8x128xf32>
    %120 = arith.divf %118, %119 : vector<8x128xf32>
    %121 = vector.extract_strided_slice %111 {offsets = [0, 128], sizes = [8, 128], strides = [1, 1]} : vector<8x384xf32> to vector<8x128xf32>
    %122 = vector.extract_strided_slice %112 {offsets = [0, 128], sizes = [8, 128], strides = [1, 1]} : vector<8x384xf32> to vector<8x128xf32>
    %123 = arith.addf %121, %122 : vector<8x128xf32>
    %124 = arith.negf %123 : vector<8x128xf32>
    %125 = math.exp %124 : vector<8x128xf32>
    %cst_31 = arith.constant 1.000000e+00 : f32
    %126 = vector.broadcast %cst_31 : f32 to vector<8x128xf32>
    %127 = arith.addf %126, %125 : vector<8x128xf32>
    %128 = arith.divf %126, %127 : vector<8x128xf32>
    %129 = vector.extract_strided_slice %111 {offsets = [0, 256], sizes = [8, 128], strides = [1, 1]} : vector<8x384xf32> to vector<8x128xf32>
    %130 = vector.extract_strided_slice %112 {offsets = [0, 256], sizes = [8, 128], strides = [1, 1]} : vector<8x384xf32> to vector<8x128xf32>
    %131 = vector.broadcast %12 : vector<1x128xf32> to vector<8x128xf32>
    %132 = arith.addf %130, %131 : vector<8x128xf32>
    %133 = arith.mulf %120, %132 : vector<8x128xf32>
    %134 = arith.addf %129, %133 : vector<8x128xf32>
    %135 = math.tanh %134 : vector<8x128xf32>
    %136 = arith.subf %106, %135 : vector<8x128xf32>
    %137 = arith.mulf %128, %136 : vector<8x128xf32>
    %138 = arith.addf %135, %137 : vector<8x128xf32>
    %c3 = arith.constant 3 : index
    %c0_32 = arith.constant 0 : index
    %c0_33 = arith.constant 0 : index
    %139 = vector.load %arg6[%c3, %c0_32, %c0_33] : memref<8x8x128xf32, #tpu.memory_space<vmem>>, vector<1x8x128xf32>
    %140 = vector.shape_cast %139 : vector<1x8x128xf32> to vector<8x128xf32>
    %141 = vector.shape_cast %138 : vector<8x128xf32> to vector<1x8x128xf32>
    tpu.vector_store %arg6[%c3, %c0_32, %c0_33], %141 {strides = array<i32>} : memref<8x8x128xf32, #tpu.memory_space<vmem>>, vector<1x8x128xf32>,
    %142 = vector.extract_strided_slice %10 {offsets = [4, 0, 0], sizes = [1, 8, 384], strides = [1, 1, 1]} : vector<8x8x384xf32> to vector<1x8x384xf32>
    %143 = vector.shape_cast %142 : vector<1x8x384xf32> to vector<8x384xf32>
    %cst_34 = arith.constant dense<0.000000e+00> : vector<8x384xf32>
    %144 = tpu.matmul %138, %11, %cst_34 {dimension_numbers = #tpu.dot_dimension_numbers<[1], [0], [0], [1], [0, 0, 1, 1], [], []>} : vector<8x128xf32>, vector<128x384xf32>, vector<8x384xf32> -> vector<8x384xf32>
    %145 = vector.extract_strided_slice %143 {offsets = [0, 0], sizes = [8, 128], strides = [1, 1]} : vector<8x384xf32> to vector<8x128xf32>
    %146 = vector.extract_strided_slice %144 {offsets = [0, 0], sizes = [8, 128], strides = [1, 1]} : vector<8x384xf32> to vector<8x128xf32>
    %147 = arith.addf %145, %146 : vector<8x128xf32>
    %148 = arith.negf %147 : vector<8x128xf32>
    %149 = math.exp %148 : vector<8x128xf32>
    %cst_35 = arith.constant 1.000000e+00 : f32
    %150 = vector.broadcast %cst_35 : f32 to vector<8x128xf32>
    %151 = arith.addf %150, %149 : vector<8x128xf32>
    %152 = arith.divf %150, %151 : vector<8x128xf32>
    %153 = vector.extract_strided_slice %143 {offsets = [0, 128], sizes = [8, 128], strides = [1, 1]} : vector<8x384xf32> to vector<8x128xf32>
    %154 = vector.extract_strided_slice %144 {offsets = [0, 128], sizes = [8, 128], strides = [1, 1]} : vector<8x384xf32> to vector<8x128xf32>
    %155 = arith.addf %153, %154 : vector<8x128xf32>
    %156 = arith.negf %155 : vector<8x128xf32>
    %157 = math.exp %156 : vector<8x128xf32>
    %cst_36 = arith.constant 1.000000e+00 : f32
    %158 = vector.broadcast %cst_36 : f32 to vector<8x128xf32>
    %159 = arith.addf %158, %157 : vector<8x128xf32>
    %160 = arith.divf %158, %159 : vector<8x128xf32>
    %161 = vector.extract_strided_slice %143 {offsets = [0, 256], sizes = [8, 128], strides = [1, 1]} : vector<8x384xf32> to vector<8x128xf32>
    %162 = vector.extract_strided_slice %144 {offsets = [0, 256], sizes = [8, 128], strides = [1, 1]} : vector<8x384xf32> to vector<8x128xf32>
    %163 = vector.broadcast %12 : vector<1x128xf32> to vector<8x128xf32>
    %164 = arith.addf %162, %163 : vector<8x128xf32>
    %165 = arith.mulf %152, %164 : vector<8x128xf32>
    %166 = arith.addf %161, %165 : vector<8x128xf32>
    %167 = math.tanh %166 : vector<8x128xf32>
    %168 = arith.subf %138, %167 : vector<8x128xf32>
    %169 = arith.mulf %160, %168 : vector<8x128xf32>
    %170 = arith.addf %167, %169 : vector<8x128xf32>
    %c4 = arith.constant 4 : index
    %c0_37 = arith.constant 0 : index
    %c0_38 = arith.constant 0 : index
    %171 = vector.load %arg6[%c4, %c0_37, %c0_38] : memref<8x8x128xf32, #tpu.memory_space<vmem>>, vector<1x8x128xf32>
    %172 = vector.shape_cast %171 : vector<1x8x128xf32> to vector<8x128xf32>
    %173 = vector.shape_cast %170 : vector<8x128xf32> to vector<1x8x128xf32>
    tpu.vector_store %arg6[%c4, %c0_37, %c0_38], %173 {strides = array<i32>} : memref<8x8x128xf32, #tpu.memory_space<vmem>>, vector<1x8x128xf32>,
    %174 = vector.extract_strided_slice %10 {offsets = [5, 0, 0], sizes = [1, 8, 384], strides = [1, 1, 1]} : vector<8x8x384xf32> to vector<1x8x384xf32>
    %175 = vector.shape_cast %174 : vector<1x8x384xf32> to vector<8x384xf32>
    %cst_39 = arith.constant dense<0.000000e+00> : vector<8x384xf32>
    %176 = tpu.matmul %170, %11, %cst_39 {dimension_numbers = #tpu.dot_dimension_numbers<[1], [0], [0], [1], [0, 0, 1, 1], [], []>} : vector<8x128xf32>, vector<128x384xf32>, vector<8x384xf32> -> vector<8x384xf32>
    %177 = vector.extract_strided_slice %175 {offsets = [0, 0], sizes = [8, 128], strides = [1, 1]} : vector<8x384xf32> to vector<8x128xf32>
    %178 = vector.extract_strided_slice %176 {offsets = [0, 0], sizes = [8, 128], strides = [1, 1]} : vector<8x384xf32> to vector<8x128xf32>
    %179 = arith.addf %177, %178 : vector<8x128xf32>
    %180 = arith.negf %179 : vector<8x128xf32>
    %181 = math.exp %180 : vector<8x128xf32>
    %cst_40 = arith.constant 1.000000e+00 : f32
    %182 = vector.broadcast %cst_40 : f32 to vector<8x128xf32>
    %183 = arith.addf %182, %181 : vector<8x128xf32>
    %184 = arith.divf %182, %183 : vector<8x128xf32>
    %185 = vector.extract_strided_slice %175 {offsets = [0, 128], sizes = [8, 128], strides = [1, 1]} : vector<8x384xf32> to vector<8x128xf32>
    %186 = vector.extract_strided_slice %176 {offsets = [0, 128], sizes = [8, 128], strides = [1, 1]} : vector<8x384xf32> to vector<8x128xf32>
    %187 = arith.addf %185, %186 : vector<8x128xf32>
    %188 = arith.negf %187 : vector<8x128xf32>
    %189 = math.exp %188 : vector<8x128xf32>
    %cst_41 = arith.constant 1.000000e+00 : f32
    %190 = vector.broadcast %cst_41 : f32 to vector<8x128xf32>
    %191 = arith.addf %190, %189 : vector<8x128xf32>
    %192 = arith.divf %190, %191 : vector<8x128xf32>
    %193 = vector.extract_strided_slice %175 {offsets = [0, 256], sizes = [8, 128], strides = [1, 1]} : vector<8x384xf32> to vector<8x128xf32>
    %194 = vector.extract_strided_slice %176 {offsets = [0, 256], sizes = [8, 128], strides = [1, 1]} : vector<8x384xf32> to vector<8x128xf32>
    %195 = vector.broadcast %12 : vector<1x128xf32> to vector<8x128xf32>
    %196 = arith.addf %194, %195 : vector<8x128xf32>
    %197 = arith.mulf %184, %196 : vector<8x128xf32>
    %198 = arith.addf %193, %197 : vector<8x128xf32>
    %199 = math.tanh %198 : vector<8x128xf32>
    %200 = arith.subf %170, %199 : vector<8x128xf32>
    %201 = arith.mulf %192, %200 : vector<8x128xf32>
    %202 = arith.addf %199, %201 : vector<8x128xf32>
    %c5 = arith.constant 5 : index
    %c0_42 = arith.constant 0 : index
    %c0_43 = arith.constant 0 : index
    %203 = vector.load %arg6[%c5, %c0_42, %c0_43] : memref<8x8x128xf32, #tpu.memory_space<vmem>>, vector<1x8x128xf32>
    %204 = vector.shape_cast %203 : vector<1x8x128xf32> to vector<8x128xf32>
    %205 = vector.shape_cast %202 : vector<8x128xf32> to vector<1x8x128xf32>
    tpu.vector_store %arg6[%c5, %c0_42, %c0_43], %205 {strides = array<i32>} : memref<8x8x128xf32, #tpu.memory_space<vmem>>, vector<1x8x128xf32>,
    %206 = vector.extract_strided_slice %10 {offsets = [6, 0, 0], sizes = [1, 8, 384], strides = [1, 1, 1]} : vector<8x8x384xf32> to vector<1x8x384xf32>
    %207 = vector.shape_cast %206 : vector<1x8x384xf32> to vector<8x384xf32>
    %cst_44 = arith.constant dense<0.000000e+00> : vector<8x384xf32>
    %208 = tpu.matmul %202, %11, %cst_44 {dimension_numbers = #tpu.dot_dimension_numbers<[1], [0], [0], [1], [0, 0, 1, 1], [], []>} : vector<8x128xf32>, vector<128x384xf32>, vector<8x384xf32> -> vector<8x384xf32>
    %209 = vector.extract_strided_slice %207 {offsets = [0, 0], sizes = [8, 128], strides = [1, 1]} : vector<8x384xf32> to vector<8x128xf32>
    %210 = vector.extract_strided_slice %208 {offsets = [0, 0], sizes = [8, 128], strides = [1, 1]} : vector<8x384xf32> to vector<8x128xf32>
    %211 = arith.addf %209, %210 : vector<8x128xf32>
    %212 = arith.negf %211 : vector<8x128xf32>
    %213 = math.exp %212 : vector<8x128xf32>
    %cst_45 = arith.constant 1.000000e+00 : f32
    %214 = vector.broadcast %cst_45 : f32 to vector<8x128xf32>
    %215 = arith.addf %214, %213 : vector<8x128xf32>
    %216 = arith.divf %214, %215 : vector<8x128xf32>
    %217 = vector.extract_strided_slice %207 {offsets = [0, 128], sizes = [8, 128], strides = [1, 1]} : vector<8x384xf32> to vector<8x128xf32>
    %218 = vector.extract_strided_slice %208 {offsets = [0, 128], sizes = [8, 128], strides = [1, 1]} : vector<8x384xf32> to vector<8x128xf32>
    %219 = arith.addf %217, %218 : vector<8x128xf32>
    %220 = arith.negf %219 : vector<8x128xf32>
    %221 = math.exp %220 : vector<8x128xf32>
    %cst_46 = arith.constant 1.000000e+00 : f32
    %222 = vector.broadcast %cst_46 : f32 to vector<8x128xf32>
    %223 = arith.addf %222, %221 : vector<8x128xf32>
    %224 = arith.divf %222, %223 : vector<8x128xf32>
    %225 = vector.extract_strided_slice %207 {offsets = [0, 256], sizes = [8, 128], strides = [1, 1]} : vector<8x384xf32> to vector<8x128xf32>
    %226 = vector.extract_strided_slice %208 {offsets = [0, 256], sizes = [8, 128], strides = [1, 1]} : vector<8x384xf32> to vector<8x128xf32>
    %227 = vector.broadcast %12 : vector<1x128xf32> to vector<8x128xf32>
    %228 = arith.addf %226, %227 : vector<8x128xf32>
    %229 = arith.mulf %216, %228 : vector<8x128xf32>
    %230 = arith.addf %225, %229 : vector<8x128xf32>
    %231 = math.tanh %230 : vector<8x128xf32>
    %232 = arith.subf %202, %231 : vector<8x128xf32>
    %233 = arith.mulf %224, %232 : vector<8x128xf32>
    %234 = arith.addf %231, %233 : vector<8x128xf32>
    %c6 = arith.constant 6 : index
    %c0_47 = arith.constant 0 : index
    %c0_48 = arith.constant 0 : index
    %235 = vector.load %arg6[%c6, %c0_47, %c0_48] : memref<8x8x128xf32, #tpu.memory_space<vmem>>, vector<1x8x128xf32>
    %236 = vector.shape_cast %235 : vector<1x8x128xf32> to vector<8x128xf32>
    %237 = vector.shape_cast %234 : vector<8x128xf32> to vector<1x8x128xf32>
    tpu.vector_store %arg6[%c6, %c0_47, %c0_48], %237 {strides = array<i32>} : memref<8x8x128xf32, #tpu.memory_space<vmem>>, vector<1x8x128xf32>,
    %238 = vector.extract_strided_slice %10 {offsets = [7, 0, 0], sizes = [1, 8, 384], strides = [1, 1, 1]} : vector<8x8x384xf32> to vector<1x8x384xf32>
    %239 = vector.shape_cast %238 : vector<1x8x384xf32> to vector<8x384xf32>
    %cst_49 = arith.constant dense<0.000000e+00> : vector<8x384xf32>
    %240 = tpu.matmul %234, %11, %cst_49 {dimension_numbers = #tpu.dot_dimension_numbers<[1], [0], [0], [1], [0, 0, 1, 1], [], []>} : vector<8x128xf32>, vector<128x384xf32>, vector<8x384xf32> -> vector<8x384xf32>
    %241 = vector.extract_strided_slice %239 {offsets = [0, 0], sizes = [8, 128], strides = [1, 1]} : vector<8x384xf32> to vector<8x128xf32>
    %242 = vector.extract_strided_slice %240 {offsets = [0, 0], sizes = [8, 128], strides = [1, 1]} : vector<8x384xf32> to vector<8x128xf32>
    %243 = arith.addf %241, %242 : vector<8x128xf32>
    %244 = arith.negf %243 : vector<8x128xf32>
    %245 = math.exp %244 : vector<8x128xf32>
    %cst_50 = arith.constant 1.000000e+00 : f32
    %246 = vector.broadcast %cst_50 : f32 to vector<8x128xf32>
    %247 = arith.addf %246, %245 : vector<8x128xf32>
    %248 = arith.divf %246, %247 : vector<8x128xf32>
    %249 = vector.extract_strided_slice %239 {offsets = [0, 128], sizes = [8, 128], strides = [1, 1]} : vector<8x384xf32> to vector<8x128xf32>
    %250 = vector.extract_strided_slice %240 {offsets = [0, 128], sizes = [8, 128], strides = [1, 1]} : vector<8x384xf32> to vector<8x128xf32>
    %251 = arith.addf %249, %250 : vector<8x128xf32>
    %252 = arith.negf %251 : vector<8x128xf32>
    %253 = math.exp %252 : vector<8x128xf32>
    %cst_51 = arith.constant 1.000000e+00 : f32
    %254 = vector.broadcast %cst_51 : f32 to vector<8x128xf32>
    %255 = arith.addf %254, %253 : vector<8x128xf32>
    %256 = arith.divf %254, %255 : vector<8x128xf32>
    %257 = vector.extract_strided_slice %239 {offsets = [0, 256], sizes = [8, 128], strides = [1, 1]} : vector<8x384xf32> to vector<8x128xf32>
    %258 = vector.extract_strided_slice %240 {offsets = [0, 256], sizes = [8, 128], strides = [1, 1]} : vector<8x384xf32> to vector<8x128xf32>
    %259 = vector.broadcast %12 : vector<1x128xf32> to vector<8x128xf32>
    %260 = arith.addf %258, %259 : vector<8x128xf32>
    %261 = arith.mulf %248, %260 : vector<8x128xf32>
    %262 = arith.addf %257, %261 : vector<8x128xf32>
    %263 = math.tanh %262 : vector<8x128xf32>
    %264 = arith.subf %234, %263 : vector<8x128xf32>
    %265 = arith.mulf %256, %264 : vector<8x128xf32>
    %266 = arith.addf %263, %265 : vector<8x128xf32>
    %c7 = arith.constant 7 : index
    %c0_52 = arith.constant 0 : index
    %c0_53 = arith.constant 0 : index
    %267 = vector.load %arg6[%c7, %c0_52, %c0_53] : memref<8x8x128xf32, #tpu.memory_space<vmem>>, vector<1x8x128xf32>
    %268 = vector.shape_cast %267 : vector<1x8x128xf32> to vector<8x128xf32>
    %269 = vector.shape_cast %266 : vector<8x128xf32> to vector<1x8x128xf32>
    tpu.vector_store %arg6[%c7, %c0_52, %c0_53], %269 {strides = array<i32>} : memref<8x8x128xf32, #tpu.memory_space<vmem>>, vector<1x8x128xf32>,
    %c0_54 = arith.constant 0 : index
    %c0_55 = arith.constant 0 : index
    %270 = vector.load %arg7[%c0_54, %c0_55] : memref<8x128xf32, #tpu.memory_space<vmem>>, vector<8x128xf32>
    tpu.vector_store %arg7[%c0_54, %c0_55], %266 {strides = array<i32>} : memref<8x128xf32, #tpu.memory_space<vmem>>, vector<8x128xf32>,
    return
  }
  func.func @transform_0(%arg0: i32) -> (i32, i32, i32) {
    %c0_i32 = arith.constant 0 : i32
    %c0_i32_0 = arith.constant 0 : i32
    %c0_i32_1 = arith.constant 0 : i32
    return %arg0, %c0_i32, %c0_i32_0 : i32, i32, i32
  }
  func.func @transform_1(%arg0: i32) -> (i32, i32) {
    %c0_i32 = arith.constant 0 : i32
    %c0_i32_0 = arith.constant 0 : i32
    %c0_i32_1 = arith.constant 0 : i32
    return %c0_i32, %c0_i32_0 : i32, i32
  }
  func.func @transform_2(%arg0: i32) -> (i32, i32) {
    %c0_i32 = arith.constant 0 : i32
    %c0_i32_0 = arith.constant 0 : i32
    %c0_i32_1 = arith.constant 0 : i32
    return %c0_i32, %c0_i32_0 : i32, i32
  }
  func.func @transform_3(%arg0: i32) -> (i32, i32) {
    %c0_i32 = arith.constant 0 : i32
    %c0_i32_0 = arith.constant 0 : i32
    %c0_i32_1 = arith.constant 0 : i32
    return %c0_i32, %c0_i32_0 : i32, i32
  }
  func.func @transform_4(%arg0: i32) -> (i32, i32) {
    %c0_i32 = arith.constant 0 : i32
    %c0_i32_0 = arith.constant 0 : i32
    %c0_i32_1 = arith.constant 0 : i32
    return %c0_i32, %c0_i32_0 : i32, i32
  }
  func.func @transform_5(%arg0: i32) -> (i32, i32, i32) {
    %c0_i32 = arith.constant 0 : i32
    %c0_i32_0 = arith.constant 0 : i32
    %c0_i32_1 = arith.constant 0 : i32
    return %arg0, %c0_i32, %c0_i32_0 : i32, i32, i32
  }
}

</mosaic_0001>

<llo_original>
// kernel: tpu_custom_call.1
$region0: #{tpu_custom_call.1}
  #allocation0 [shape = 'u32[]', space=smem, size = 0x4, offset = 0x4, fixed_abs, tag = 'smem constant byte address 0x4 - core index']
  #allocation1 [shape = 'u32[144,128]{1,0:T(1,128)}', space=vmem, size = 0x12000, scoped, tag = 'internal scratch']
  #allocation2 [shape = 'f32[8,128]{1,0:T(8,128)}', space=vmem, size = 0x1000, scoped, tag = 'scratch operand']
  %s0 = inlined_call_operand.hbm [shape: f32[8,8,8], index: 0, kind: input, shape index: {}]
  %s1 = inlined_call_operand.hbm [shape: f32[8,384], index: 1, kind: input, shape index: {}]
  %s2 = inlined_call_operand.hbm [shape: f32[128,384], index: 2, kind: input, shape index: {}]
  %s3 = inlined_call_operand.vmem [shape: f32[1,384], index: 3, kind: input, shape index: {}]
  %s4 = inlined_call_operand.vmem [shape: f32[1,128], index: 4, kind: input, shape index: {}]
  %s5 = inlined_call_operand.hbm [shape: f32[8,8,128], index: 5, kind: output, shape index: {}]
  %s6 = sld [smem:[#allocation0]]
  $region46: #{tpu_custom_call.1} parent=0
    _
  %s8 = ssub.s32 1, %s6
  %s9 = scalar_select 0, %s8, %s6
  $region1: #{tpu_custom_call.1} parent=0
    #allocation3 [shape = 'u8[32768]{0}', space=vmem, size = 0x8000, scoped, tag = 'input window, operand 0, single buffered']
    #allocation4 [shape = 's32[1]{0}', space=sflag, size = 0x4, scoped, tag = 'scoped memory for tpu_custom_call.1']
    #allocation5 [shape = 's32[1]{0}', space=sflag, size = 0x4, scoped, tag = 'scoped memory for tpu_custom_call.1']
    #allocation6 [shape = 'u8[12288]{0}', space=vmem, size = 0x3000, scoped, tag = 'input window, operand 1, single buffered']
    #allocation7 [shape = 's32[1]{0}', space=sflag, size = 0x4, scoped, tag = 'scoped memory for tpu_custom_call.1']
    #allocation8 [shape = 'u8[196608]{0}', space=vmem, size = 0x30000, scoped, tag = 'input window, operand 2, single buffered']
    #allocation9 [shape = 'u8[32768]{0}', space=vmem, size = 0x8000, scoped, tag = 'output window, operand 0, single buffered']
    %10 = vsyncpa [#allocation4], 0
    %11 = vsyncpa [#allocation7], 0
    %12 = vsyncpa [#allocation5], 0
    // Predicated region
    $region2: #{tpu_custom_call.1} parent=1 // pred_check
      _
    $region3: #{tpu_custom_call.1} parent=1 // pred_check_branch
      %14 = sbr.rel (0) target = $region5
    $region4: #{tpu_custom_call.1} parent=1 // pred_region
      %s16 = ssub.s32 1024, 1024
      %17 = vsyncadd [#allocation4], %s16
      %s18 = sshll.u32 [#allocation3], 4
      %s19 = int_to_ptr.vmem [resolvable:$true] %s18
      %24 = dma.hbm_to_vmem [thread:$0]  %s0, 1024, %s19, [#allocation4], 128, 128, 8
    $region5: #{tpu_custom_call.1} parent=1 // pred_fallthru
      _
    // Predicated region
    $region6: #{tpu_custom_call.1} parent=1 // pred_check
      _
    $region7: #{tpu_custom_call.1} parent=1 // pred_check_branch
      %26 = sbr.rel (0) target = $region9
    $region8: #{tpu_custom_call.1} parent=1 // pred_region
      %s28 = ssub.s32 384, 384
      %29 = vsyncadd [#allocation7], %s28
      %s31 = sshll.u32 [#allocation6], 4
      %s32 = int_to_ptr.vmem [resolvable:$true] %s31
      %34 = dma.hbm_to_vmem [thread:$0]  %s1, 384, %s32, [#allocation7]
    $region9: #{tpu_custom_call.1} parent=1 // pred_fallthru
      _
    // Predicated region
    $region10: #{tpu_custom_call.1} parent=1 // pred_check
      _
    $region11: #{tpu_custom_call.1} parent=1 // pred_check_branch
      %36 = sbr.rel (0) target = $region13
    $region12: #{tpu_custom_call.1} parent=1 // pred_region
      %s38 = ssub.s32 6144, 6144
      %39 = vsyncadd [#allocation7], %s38
      %s40 = sshll.u32 [#allocation8], 4
      %s41 = int_to_ptr.vmem [resolvable:$true] %s40
      %46 = dma.hbm_to_vmem [thread:$0]  %s2, 6144, %s41, [#allocation7], 384, 384, 24
    $region13: #{tpu_custom_call.1} parent=1 // pred_fallthru
      _
    // Predicated region
    $region14: #{tpu_custom_call.1} parent=1 // pred_check
      _
    $region15: #{tpu_custom_call.1} parent=1 // pred_check_branch
      %48 = sbr.rel (0) target = $region17
    $region16: #{tpu_custom_call.1} parent=1 // pred_region
      _
    $region17: #{tpu_custom_call.1} parent=1 // pred_fallthru
      _
    // Predicated region
    $region18: #{tpu_custom_call.1} parent=1 // pred_check
      _
    $region19: #{tpu_custom_call.1} parent=1 // pred_check_branch
      %50 = sbr.rel (0) target = $region21
    $region20: #{tpu_custom_call.1} parent=1 // pred_region
      _
    $region21: #{tpu_custom_call.1} parent=1 // pred_fallthru
      _
    // Predicated region
    $region22: #{tpu_custom_call.1} parent=1 // pred_check
      _
    $region23: #{tpu_custom_call.1} parent=1 // pred_check_branch
      %52 = sbr.rel (0) target = $region25
    $region24: #{tpu_custom_call.1} parent=1 // pred_region
      %53 = dma.done [#allocation4], 1024
    $region25: #{tpu_custom_call.1} parent=1 // pred_fallthru
      _
    // Predicated region
    $region26: #{tpu_custom_call.1} parent=1 // pred_check
      _
    $region27: #{tpu_custom_call.1} parent=1 // pred_check_branch
      %55 = sbr.rel (0) target = $region29
    $region28: #{tpu_custom_call.1} parent=1 // pred_region
      %56 = dma.done [#allocation7], 384
    $region29: #{tpu_custom_call.1} parent=1 // pred_fallthru
      _
    // Predicated region
    $region30: #{tpu_custom_call.1} parent=1 // pred_check
      _
    $region31: #{tpu_custom_call.1} parent=1 // pred_check_branch
      %58 = sbr.rel (0) target = $region33
    $region32: #{tpu_custom_call.1} parent=1 // pred_region
      %59 = dma.done [#allocation7], 6144
    $region33: #{tpu_custom_call.1} parent=1 // pred_fallthru
      _
    %p60 = scmp.eq.s32.totalorder 0, 0
    // Predicated region
    $region34: #{tpu_custom_call.1} parent=1 // pred_check
      %p61 = pneg %p60
    $region35: #{tpu_custom_call.1} parent=1 // pred_check_branch
      %63 = sbr.rel (%p61) target = $region37
    $region36: #{tpu_custom_call.1} parent=1 // pred_region
      %64 = vst [vmem:[#allocation2] sm:$0xff] 0.0
    $region37: #{tpu_custom_call.1} parent=1 // pred_fallthru
      _
    %v65 = vld [vmem:[#allocation3] sm:$0xff]
    %v66 = vld [vmem:[#allocation3 + $0x8] sm:$0xff]
    %v67 = vld [vmem:[#allocation3 + $0x10] sm:$0xff]
    %v68 = vld [vmem:[#allocation3 + $0x18] sm:$0xff]
    %v69 = vld [vmem:[#allocation3 + $0x20] sm:$0xff]
    %v70 = vld [vmem:[#allocation3 + $0x28] sm:$0xff]
    %v71 = vld [vmem:[#allocation3 + $0x30] sm:$0xff]
    %v72 = vld [vmem:[#allocation3 + $0x38] sm:$0xff]
    %v73 = vld [vmem:[#allocation6] sm:$0xff]
    %v74 = vld [vmem:[#allocation6 + $0x8] sm:$0xff]
    %v75 = vld [vmem:[#allocation6 + $0x10] sm:$0xff]
    %v76 = vld [vmem:[%s3] sm:$0x7]
    %v78 = vlaneseq
    %v79 = vshrl.u32 %v78, 7
    %v80 = vsub.s32 0, %v79
    %v81 = vrot.slane %v76, %v80
    %v82 = vlaneseq
    %v83 = vshrl.u32 %v82, 7
    %v84 = vsub.s32 1, %v83
    %v85 = vrot.slane %v76, %v84
    %v86 = vlaneseq
    %v87 = vshrl.u32 %v86, 7
    %v88 = vsub.s32 2, %v87
    %v89 = vrot.slane %v76, %v88
    %vm93 = vcmask 64512
    %v95 = vsel %vm93, %v65, 0
    %v98 = vsel %vm93, %v66, 0
    %v101 = vsel %vm93, %v67, 0
    %v104 = vsel %vm93, %v68, 0
    %v107 = vsel %vm93, %v69, 0
    %v110 = vsel %vm93, %v70, 0
    %v113 = vsel %vm93, %v71, 0
    %v116 = vsel %vm93, %v72, 0
    %118 = vmatprep.subr.mxu0 0.0
    %119 = vmatpush1.msra.mxu0 0.0
    %120 = vmatprep.subr.mxu0 0.0
    %121 = vmatpush1.msra.mxu0 0.0
    %122 = vmatprep.subr.mxu0 0.0
    %123 = vmatpush1.msra.mxu0 0.0
    %124 = vmatprep.subr.mxu0 0.0
    %125 = vmatpush1.msra.mxu0 0.0
    %126 = vmatprep.subr.mxu0 0.0
    %127 = vmatpush1.msra.mxu0 0.0
    %128 = vmatprep.subr.mxu0 0.0
    %129 = vmatpush1.msra.mxu0 0.0
    %130 = vmatprep.subr.mxu0 0.0
    %131 = vmatpush1.msra.mxu0 0.0
    %132 = vmatprep.subr.mxu0 0.0
    %133 = vmatpush1.msra.mxu0 0.0
    %134 = vmatprep.subr.mxu0 0.0
    %135 = vmatpush1.msra.mxu0 0.0
    %136 = vmatprep.subr.mxu0 0.0
    %137 = vmatpush1.msra.mxu0 0.0
    %138 = vmatprep.subr.mxu0 0.0
    %139 = vmatpush1.msra.mxu0 0.0
    %140 = vmatprep.subr.mxu0 0.0
    %141 = vmatpush1.msra.mxu0 0.0
    %142 = vmatprep.subr.mxu0 0.0
    %143 = vmatpush1.msra.mxu0 0.0
    %144 = vmatprep.subr.mxu0 0.0
    %145 = vmatpush1.msra.mxu0 0.0
    %146 = vmatprep.subr.mxu0 0.0
    %147 = vmatpush1.msra.mxu0 0.0
    %148 = vmatprep.subr.mxu0 %v74
    %149 = vmatpush1.msra.mxu0 %v73
    %150 = vmatprep.subr.mxu0 0.0
    %151 = vmatpush2.msra.mxu0 0.0
    %152 = vmatprep.subr.mxu0 0.0
    %153 = vmatpush2.msra.mxu0 0.0
    %154 = vmatprep.subr.mxu0 0.0
    %155 = vmatpush2.msra.mxu0 0.0
    %156 = vmatprep.subr.mxu0 0.0
    %157 = vmatpush2.msra.mxu0 0.0
    %158 = vmatprep.subr.mxu0 0.0
    %159 = vmatpush2.msra.mxu0 0.0
    %160 = vmatprep.subr.mxu0 0.0
    %161 = vmatpush2.msra.mxu0 0.0
    %162 = vmatprep.subr.mxu0 0.0
    %163 = vmatpush2.msra.mxu0 0.0
    %164 = vmatprep.subr.mxu0 0.0
    %165 = vmatpush2.msra.mxu0 0.0
    %166 = vmatprep.subr.mxu0 0.0
    %167 = vmatpush2.msra.mxu0 0.0
    %168 = vmatprep.subr.mxu0 0.0
    %169 = vmatpush2.msra.mxu0 0.0
    %170 = vmatprep.subr.mxu0 0.0
    %171 = vmatpush2.msra.mxu0 0.0
    %172 = vmatprep.subr.mxu0 0.0
    %173 = vmatpush2.msra.mxu0 0.0
    %174 = vmatprep.subr.mxu0 0.0
    %175 = vmatpush2.msra.mxu0 0.0
    %176 = vmatprep.subr.mxu0 0.0
    %177 = vmatpush2.msra.mxu0 0.0
    %178 = vmatprep.subr.mxu0 0.0
    %179 = vmatpush2.msra.mxu0 0.0
    %180 = vmatprep.subr.mxu0 0.0
    %181 = vmatpush2.msra.mxu0 0.0
    %182 = vmatprep.mubr.f32.mxu0 0.0
    %183 = vmatmul.mubr.f32.gmra.mxu0 %v95
    %v184 = vpop.f32.mrf.mxu0
    %v185 = vadd.f32 %v81, %v184
    %v186 = vpop.f32.mrf.mxu0
    %v187 = vadd.f32 %v85, %v186
    %188 = vmatprep.mubr.f32.mxu0 0.0
    %189 = vmatmul.mubr.f32.gmra.mxu0 %v98
    %v190 = vpop.f32.mrf.mxu0
    %v191 = vadd.f32 %v81, %v190
    %v192 = vpop.f32.mrf.mxu0
    %v193 = vadd.f32 %v85, %v192
    %194 = vmatprep.mubr.f32.mxu0 0.0
    %195 = vmatmul.mubr.f32.gmra.mxu0 %v101
    %v196 = vpop.f32.mrf.mxu0
    %v197 = vadd.f32 %v81, %v196
    %v198 = vpop.f32.mrf.mxu0
    %v199 = vadd.f32 %v85, %v198
    %200 = vmatprep.mubr.f32.mxu0 0.0
    %201 = vmatmul.mubr.f32.gmra.mxu0 %v104
    %v202 = vpop.f32.mrf.mxu0
    %v203 = vadd.f32 %v81, %v202
    %v204 = vpop.f32.mrf.mxu0
    %v205 = vadd.f32 %v85, %v204
    %206 = vmatprep.mubr.f32.mxu0 0.0
    %207 = vmatmul.mubr.f32.gmra.mxu0 %v107
    %v208 = vpop.f32.mrf.mxu0
    %v209 = vadd.f32 %v81, %v208
    %v210 = vpop.f32.mrf.mxu0
    %v211 = vadd.f32 %v85, %v210
    %212 = vmatprep.mubr.f32.mxu0 0.0
    %213 = vmatmul.mubr.f32.gmra.mxu0 %v110
    %v214 = vpop.f32.mrf.mxu0
    %v215 = vadd.f32 %v81, %v214
    %v216 = vpop.f32.mrf.mxu0
    %v217 = vadd.f32 %v85, %v216
    %218 = vmatprep.mubr.f32.mxu0 0.0
    %219 = vmatmul.mubr.f32.gmra.mxu0 %v113
    %v220 = vpop.f32.mrf.mxu0
    %v221 = vadd.f32 %v81, %v220
    %v222 = vpop.f32.mrf.mxu0
    %v223 = vadd.f32 %v85, %v222
    %224 = vmatprep.mubr.f32.mxu0 0.0
    %225 = vmatmul.mubr.f32.gmra.mxu0 %v116
    %v226 = vpop.f32.mrf.mxu0
    %v227 = vadd.f32 %v81, %v226
    %v228 = vpop.f32.mrf.mxu0
    %v229 = vadd.f32 %v85, %v228
    %230 = vdwg.mxu0
    %231 = vmatprep.subr.mxu0 0.0
    %232 = vmatpush1.msra.mxu0 0.0
    %233 = vmatprep.subr.mxu0 0.0
    %234 = vmatpush1.msra.mxu0 0.0
    %235 = vmatprep.subr.mxu0 0.0
    %236 = vmatpush1.msra.mxu0 0.0
    %237 = vmatprep.subr.mxu0 0.0
    %238 = vmatpush1.msra.mxu0 0.0
    %239 = vmatprep.subr.mxu0 0.0
    %240 = vmatpush1.msra.mxu0 0.0
    %241 = vmatprep.subr.mxu0 0.0
    %242 = vmatpush1.msra.mxu0 0.0
    %243 = vmatprep.subr.mxu0 0.0
    %244 = vmatpush1.msra.mxu0 0.0
    %245 = vmatprep.subr.mxu0 0.0
    %246 = vmatpush1.msra.mxu0 0.0
    %247 = vmatprep.subr.mxu0 0.0
    %248 = vmatpush1.msra.mxu0 0.0
    %249 = vmatprep.subr.mxu0 0.0
    %250 = vmatpush1.msra.mxu0 0.0
    %251 = vmatprep.subr.mxu0 0.0
    %252 = vmatpush1.msra.mxu0 0.0
    %253 = vmatprep.subr.mxu0 0.0
    %254 = vmatpush1.msra.mxu0 0.0
    %255 = vmatprep.subr.mxu0 0.0
    %256 = vmatpush1.msra.mxu0 0.0
    %257 = vmatprep.subr.mxu0 0.0
    %258 = vmatpush1.msra.mxu0 0.0
    %259 = vmatprep.subr.mxu0 0.0
    %260 = vmatpush1.msra.mxu0 0.0
    %261 = vmatprep.subr.mxu0 0.0
    %262 = vmatpush1.msra.mxu0 %v75
    %263 = vmatprep.subr.mxu0 0.0
    %264 = vmatpush2.msra.mxu0 0.0
    %265 = vmatprep.subr.mxu0 0.0
    %266 = vmatpush2.msra.mxu0 0.0
    %267 = vmatprep.subr.mxu0 0.0
    %268 = vmatpush2.msra.mxu0 0.0
    %269 = vmatprep.subr.mxu0 0.0
    %270 = vmatpush2.msra.mxu0 0.0
    %271 = vmatprep.subr.mxu0 0.0
    %272 = vmatpush2.msra.mxu0 0.0
    %273 = vmatprep.subr.mxu0 0.0
    %274 = vmatpush2.msra.mxu0 0.0
    %275 = vmatprep.subr.mxu0 0.0
    %276 = vmatpush2.msra.mxu0 0.0
    %277 = vmatprep.subr.mxu0 0.0
    %278 = vmatpush2.msra.mxu0 0.0
    %279 = vmatprep.subr.mxu0 0.0
    %280 = vmatpush2.msra.mxu0 0.0
    %281 = vmatprep.subr.mxu0 0.0
    %282 = vmatpush2.msra.mxu0 0.0
    %283 = vmatprep.subr.mxu0 0.0
    %284 = vmatpush2.msra.mxu0 0.0
    %285 = vmatprep.subr.mxu0 0.0
    %286 = vmatpush2.msra.mxu0 0.0
    %287 = vmatprep.subr.mxu0 0.0
    %288 = vmatpush2.msra.mxu0 0.0
    %289 = vmatprep.subr.mxu0 0.0
    %290 = vmatpush2.msra.mxu0 0.0
    %291 = vmatprep.subr.mxu0 0.0
    %292 = vmatpush2.msra.mxu0 0.0
    %293 = vmatprep.subr.mxu0 0.0
    %294 = vmatpush2.msra.mxu0 0.0
    %295 = vmatprep.mubr.f32.mxu0 0.0
    %296 = vmatmul.mubr.f32.gmra.mxu0 %v95
    %v297 = vpop.f32.mrf.mxu0
    %v298 = vadd.f32 %v89, %v297
    %v299 = vpop.f32.mrf.mxu0
    %300 = vmatprep.mubr.f32.mxu0 0.0
    %301 = vmatmul.mubr.f32.gmra.mxu0 %v98
    %v302 = vpop.f32.mrf.mxu0
    %v303 = vadd.f32 %v89, %v302
    %v304 = vpop.f32.mrf.mxu0
    %305 = vmatprep.mubr.f32.mxu0 0.0
    %306 = vmatmul.mubr.f32.gmra.mxu0 %v101
    %v307 = vpop.f32.mrf.mxu0
    %v308 = vadd.f32 %v89, %v307
    %v309 = vpop.f32.mrf.mxu0
    %310 = vmatprep.mubr.f32.mxu0 0.0
    %311 = vmatmul.mubr.f32.gmra.mxu0 %v104
    %v312 = vpop.f32.mrf.mxu0
    %v313 = vadd.f32 %v89, %v312
    %v314 = vpop.f32.mrf.mxu0
    %315 = vmatprep.mubr.f32.mxu0 0.0
    %316 = vmatmul.mubr.f32.gmra.mxu0 %v107
    %v317 = vpop.f32.mrf.mxu0
    %v318 = vadd.f32 %v89, %v317
    %v319 = vpop.f32.mrf.mxu0
    %320 = vmatprep.mubr.f32.mxu0 0.0
    %321 = vmatmul.mubr.f32.gmra.mxu0 %v110
    %v322 = vpop.f32.mrf.mxu0
    %v323 = vadd.f32 %v89, %v322
    %v324 = vpop.f32.mrf.mxu0
    %325 = vmatprep.mubr.f32.mxu0 0.0
    %326 = vmatmul.mubr.f32.gmra.mxu0 %v113
    %v327 = vpop.f32.mrf.mxu0
    %v328 = vadd.f32 %v89, %v327
    %v329 = vpop.f32.mrf.mxu0
    %330 = vmatprep.mubr.f32.mxu0 0.0
    %331 = vmatmul.mubr.f32.gmra.mxu0 %v116
    %v332 = vpop.f32.mrf.mxu0
    %v333 = vadd.f32 %v89, %v332
    %v334 = vpop.f32.mrf.mxu0
    %335 = vdwg.mxu0
    %v336 = vld [vmem:[#allocation8] sm:$0xff]
    %v337 = vld [vmem:[#allocation8 + $0x8] sm:$0xff]
    %v338 = vld [vmem:[#allocation8 + $0x10] sm:$0xff]
    %v339 = vld [vmem:[#allocation8 + $0x18] sm:$0xff]
    %v340 = vld [vmem:[#allocation8 + $0x20] sm:$0xff]
    %v341 = vld [vmem:[#allocation8 + $0x28] sm:$0xff]
    %v342 = vld [vmem:[#allocation8 + $0x30] sm:$0xff]
    %v343 = vld [vmem:[#allocation8 + $0x38] sm:$0xff]
    %v344 = vld [vmem:[#allocation8 + $0x40] sm:$0xff]
    %v345 = vld [vmem:[#allocation8 + $0x48] sm:$0xff]
    %v346 = vld [vmem:[#allocation8 + $0x50] sm:$0xff]
    %v347 = vld [vmem:[#allocation8 + $0x58] sm:$0xff]
    %v348 = vld [vmem:[#allocation8 + $0x60] sm:$0xff]
    %v349 = vld [vmem:[#allocation8 + $0x68] sm:$0xff]
    %v350 = vld [vmem:[#allocation8 + $0x70] sm:$0xff]
    %v351 = vld [vmem:[#allocation8 + $0x78] sm:$0xff]
    %v352 = vld [vmem:[#allocation8 + $0x80] sm:$0xff]
    %v353 = vld [vmem:[#allocation8 + $0x88] sm:$0xff]
    %v354 = vld [vmem:[#allocation8 + $0x90] sm:$0xff]
    %v355 = vld [vmem:[#allocation8 + $0x98] sm:$0xff]
    %v356 = vld [vmem:[#allocation8 + $0xa0] sm:$0xff]
    %v357 = vld [vmem:[#allocation8 + $0xa8] sm:$0xff]
    %v358 = vld [vmem:[#allocation8 + $0xb0] sm:$0xff]
    %v359 = vld [vmem:[#allocation8 + $0xb8] sm:$0xff]
    %v360 = vld [vmem:[#allocation8 + $0xc0] sm:$0xff]
    %v361 = vld [vmem:[#allocation8 + $0xc8] sm:$0xff]
    %v362 = vld [vmem:[#allocation8 + $0xd0] sm:$0xff]
    %v363 = vld [vmem:[#allocation8 + $0xd8] sm:$0xff]
    %v364 = vld [vmem:[#allocation8 + $0xe0] sm:$0xff]
    %v365 = vld [vmem:[#allocation8 + $0xe8] sm:$0xff]
    %v366 = vld [vmem:[#allocation8 + $0xf0] sm:$0xff]
    %v367 = vld [vmem:[#allocation8 + $0xf8] sm:$0xff]
    %v368 = vld [vmem:[#allocation8 + $0x100] sm:$0xff]
    %v369 = vld [vmem:[#allocation8 + $0x108] sm:$0xff]
    %v370 = vld [vmem:[#allocation8 + $0x110] sm:$0xff]
    %v371 = vld [vmem:[#allocation8 + $0x118] sm:$0xff]
    %v372 = vld [vmem:[#allocation8 + $0x120] sm:$0xff]
    %v373 = vld [vmem:[#allocation8 + $0x128] sm:$0xff]
    %v374 = vld [vmem:[#allocation8 + $0x130] sm:$0xff]
    %v375 = vld [vmem:[#allocation8 + $0x138] sm:$0xff]
    %v376 = vld [vmem:[#allocation8 + $0x140] sm:$0xff]
    %v377 = vld [vmem:[#allocation8 + $0x148] sm:$0xff]
    %v378 = vld [vmem:[#allocation8 + $0x150] sm:$0xff]
    %v379 = vld [vmem:[#allocation8 + $0x158] sm:$0xff]
    %v380 = vld [vmem:[#allocation8 + $0x160] sm:$0xff]
    %v381 = vld [vmem:[#allocation8 + $0x168] sm:$0xff]
    %v382 = vld [vmem:[#allocation8 + $0x170] sm:$0xff]
    %v383 = vld [vmem:[#allocation8 + $0x178] sm:$0xff]
    %v384 = vld [vmem:[%s4] sm:$0x1]
    %v385 = vld [vmem:[#allocation2] sm:$0xff]
    %386 = vmatprep.subr.mxu0 %v382
    %387 = vmatpush1.msra.mxu0 %v381
    %388 = vmatprep.subr.mxu0 %v379
    %389 = vmatpush1.msra.mxu0 %v378
    %390 = vmatprep.subr.mxu0 %v376
    %391 = vmatpush1.msra.mxu0 %v375
    %392 = vmatprep.subr.mxu0 %v373
    %393 = vmatpush1.msra.mxu0 %v372
    %394 = vmatprep.subr.mxu0 %v370
    %395 = vmatpush1.msra.mxu0 %v369
    %396 = vmatprep.subr.mxu0 %v367
    %397 = vmatpush1.msra.mxu0 %v366
    %398 = vmatprep.subr.mxu0 %v364
    %399 = vmatpush1.msra.mxu0 %v363
    %400 = vmatprep.subr.mxu0 %v361
    %401 = vmatpush1.msra.mxu0 %v360
    %402 = vmatprep.subr.mxu0 %v358
    %403 = vmatpush1.msra.mxu0 %v357
    %404 = vmatprep.subr.mxu0 %v355
    %405 = vmatpush1.msra.mxu0 %v354
    %406 = vmatprep.subr.mxu0 %v352
    %407 = vmatpush1.msra.mxu0 %v351
    %408 = vmatprep.subr.mxu0 %v349
    %409 = vmatpush1.msra.mxu0 %v348
    %410 = vmatprep.subr.mxu0 %v346
    %411 = vmatpush1.msra.mxu0 %v345
    %412 = vmatprep.subr.mxu0 %v343
    %413 = vmatpush1.msra.mxu0 %v342
    %414 = vmatprep.subr.mxu0 %v340
    %415 = vmatpush1.msra.mxu0 %v339
    %416 = vmatprep.subr.mxu0 %v337
    %417 = vmatpush1.msra.mxu0 %v336
    %418 = vmatprep.subr.mxu0 0.0
    %419 = vmatpush2.msra.mxu0 0.0
    %420 = vmatprep.subr.mxu0 0.0
    %421 = vmatpush2.msra.mxu0 0.0
    %422 = vmatprep.subr.mxu0 0.0
    %423 = vmatpush2.msra.mxu0 0.0
    %424 = vmatprep.subr.mxu0 0.0
    %425 = vmatpush2.msra.mxu0 0.0
    %426 = vmatprep.subr.mxu0 0.0
    %427 = vmatpush2.msra.mxu0 0.0
    %428 = vmatprep.subr.mxu0 0.0
    %429 = vmatpush2.msra.mxu0 0.0
    %430 = vmatprep.subr.mxu0 0.0
    %431 = vmatpush2.msra.mxu0 0.0
    %432 = vmatprep.subr.mxu0 0.0
    %433 = vmatpush2.msra.mxu0 0.0
    %434 = vmatprep.subr.mxu0 0.0
    %435 = vmatpush2.msra.mxu0 0.0
    %436 = vmatprep.subr.mxu0 0.0
    %437 = vmatpush2.msra.mxu0 0.0
    %438 = vmatprep.subr.mxu0 0.0
    %439 = vmatpush2.msra.mxu0 0.0
    %440 = vmatprep.subr.mxu0 0.0
    %441 = vmatpush2.msra.mxu0 0.0
    %442 = vmatprep.subr.mxu0 0.0
    %443 = vmatpush2.msra.mxu0 0.0
    %444 = vmatprep.subr.mxu0 0.0
    %445 = vmatpush2.msra.mxu0 0.0
    %446 = vmatprep.subr.mxu0 0.0
    %447 = vmatpush2.msra.mxu0 0.0
    %448 = vmatprep.subr.mxu0 0.0
    %449 = vmatpush2.msra.mxu0 0.0
    %450 = vmatprep.mubr.f32.mxu0 0.0
    %451 = vmatmul.mubr.f32.gmra.mxu0 %v385
    %v452 = vpop.f32.mrf.mxu0
    %v453 = vadd.f32 0.0, %v452
    %v454 = vpop.f32.mrf.mxu0
    %v455 = vadd.f32 0.0, %v454
    %456 = vdwg.mxu0
    %457 = vmatprep.subr.mxu0 0.0
    %458 = vmatpush1.msra.mxu0 %v383
    %459 = vmatprep.subr.mxu0 0.0
    %460 = vmatpush1.msra.mxu0 %v380
    %461 = vmatprep.subr.mxu0 0.0
    %462 = vmatpush1.msra.mxu0 %v377
    %463 = vmatprep.subr.mxu0 0.0
    %464 = vmatpush1.msra.mxu0 %v374
    %465 = vmatprep.subr.mxu0 0.0
    %466 = vmatpush1.msra.mxu0 %v371
    %467 = vmatprep.subr.mxu0 0.0
    %468 = vmatpush1.msra.mxu0 %v368
    %469 = vmatprep.subr.mxu0 0.0
    %470 = vmatpush1.msra.mxu0 %v365
    %471 = vmatprep.subr.mxu0 0.0
    %472 = vmatpush1.msra.mxu0 %v362
    %473 = vmatprep.subr.mxu0 0.0
    %474 = vmatpush1.msra.mxu0 %v359
    %475 = vmatprep.subr.mxu0 0.0
    %476 = vmatpush1.msra.mxu0 %v356
    %477 = vmatprep.subr.mxu0 0.0
    %478 = vmatpush1.msra.mxu0 %v353
    %479 = vmatprep.subr.mxu0 0.0
    %480 = vmatpush1.msra.mxu0 %v350
    %481 = vmatprep.subr.mxu0 0.0
    %482 = vmatpush1.msra.mxu0 %v347
    %483 = vmatprep.subr.mxu0 0.0
    %484 = vmatpush1.msra.mxu0 %v344
    %485 = vmatprep.subr.mxu0 0.0
    %486 = vmatpush1.msra.mxu0 %v341
    %487 = vmatprep.subr.mxu0 0.0
    %488 = vmatpush1.msra.mxu0 %v338
    %489 = vmatprep.subr.mxu0 0.0
    %490 = vmatpush2.msra.mxu0 0.0
    %491 = vmatprep.subr.mxu0 0.0
    %492 = vmatpush2.msra.mxu0 0.0
    %493 = vmatprep.subr.mxu0 0.0
    %494 = vmatpush2.msra.mxu0 0.0
    %495 = vmatprep.subr.mxu0 0.0
    %496 = vmatpush2.msra.mxu0 0.0
    %497 = vmatprep.subr.mxu0 0.0
    %498 = vmatpush2.msra.mxu0 0.0
    %499 = vmatprep.subr.mxu0 0.0
    %500 = vmatpush2.msra.mxu0 0.0
    %501 = vmatprep.subr.mxu0 0.0
    %502 = vmatpush2.msra.mxu0 0.0
    %503 = vmatprep.subr.mxu0 0.0
    %504 = vmatpush2.msra.mxu0 0.0
    %505 = vmatprep.subr.mxu0 0.0
    %506 = vmatpush2.msra.mxu0 0.0
    %507 = vmatprep.subr.mxu0 0.0
    %508 = vmatpush2.msra.mxu0 0.0
    %509 = vmatprep.subr.mxu0 0.0
    %510 = vmatpush2.msra.mxu0 0.0
    %511 = vmatprep.subr.mxu0 0.0
    %512 = vmatpush2.msra.mxu0 0.0
    %513 = vmatprep.subr.mxu0 0.0
    %514 = vmatpush2.msra.mxu0 0.0
    %515 = vmatprep.subr.mxu0 0.0
    %516 = vmatpush2.msra.mxu0 0.0
    %517 = vmatprep.subr.mxu0 0.0
    %518 = vmatpush2.msra.mxu0 0.0
    %519 = vmatprep.subr.mxu0 0.0
    %520 = vmatpush2.msra.mxu0 0.0
    %521 = vmatprep.mubr.f32.mxu0 0.0
    %522 = vmatmul.mubr.f32.gmra.mxu0 %v385
    %v523 = vpop.f32.mrf.mxu0
    %v524 = vadd.f32 0.0, %v523
    %v525 = vpop.f32.mrf.mxu0
    %526 = vdwg.mxu0
    %v527 = vadd.f32 %v185, %v453
    %v528 = vxor.u32 %v527, 2147483648
    %v529 = vmul.f32 %v528, 1.442695
    %v530 = vpow.pop %v529
    %v531 = vadd.f32 %v530, 1.0
    %v532 = vrcp.pop %v531
    %v533 = vmul.f32 1.0, %v532
    %v534 = vadd.f32 %v187, %v455
    %v535 = vxor.u32 %v534, 2147483648
    %v536 = vmul.f32 %v535, 1.442695
    %v537 = vpow.pop %v536
    %v538 = vadd.f32 %v537, 1.0
    %v539 = vrcp.pop %v538
    %v540 = vmul.f32 1.0, %v539
    %v542 = vlaneseq
    %v543 = vshrl.u32 %v542, 7
    %v544 = vsub.s32 0, %v543
    %v545 = vrot.slane %v384, %v544
    %v547 = vadd.f32 %v524, %v545
    %v548 = vmul.f32 %v533, %v547
    %v549 = vadd.f32 %v298, %v548
    %v550 = vtanh.pop %v549
    %v551 = vsub.f32 %v385, %v550
    %v552 = vmul.f32 %v540, %v551
    %v553 = vadd.f32 %v550, %v552
    %554 = vst [vmem:[#allocation9] sm:$0xff] %v553
    %555 = vmatprep.subr.mxu0 %v382
    %556 = vmatpush1.msra.mxu0 %v381
    %557 = vmatprep.subr.mxu0 %v379
    %558 = vmatpush1.msra.mxu0 %v378
    %559 = vmatprep.subr.mxu0 %v376
    %560 = vmatpush1.msra.mxu0 %v375
    %561 = vmatprep.subr.mxu0 %v373
    %562 = vmatpush1.msra.mxu0 %v372
    %563 = vmatprep.subr.mxu0 %v370
    %564 = vmatpush1.msra.mxu0 %v369
    %565 = vmatprep.subr.mxu0 %v367
    %566 = vmatpush1.msra.mxu0 %v366
    %567 = vmatprep.subr.mxu0 %v364
    %568 = vmatpush1.msra.mxu0 %v363
    %569 = vmatprep.subr.mxu0 %v361
    %570 = vmatpush1.msra.mxu0 %v360
    %571 = vmatprep.subr.mxu0 %v358
    %572 = vmatpush1.msra.mxu0 %v357
    %573 = vmatprep.subr.mxu0 %v355
    %574 = vmatpush1.msra.mxu0 %v354
    %575 = vmatprep.subr.mxu0 %v352
    %576 = vmatpush1.msra.mxu0 %v351
    %577 = vmatprep.subr.mxu0 %v349
    %578 = vmatpush1.msra.mxu0 %v348
    %579 = vmatprep.subr.mxu0 %v346
    %580 = vmatpush1.msra.mxu0 %v345
    %581 = vmatprep.subr.mxu0 %v343
    %582 = vmatpush1.msra.mxu0 %v342
    %583 = vmatprep.subr.mxu0 %v340
    %584 = vmatpush1.msra.mxu0 %v339
    %585 = vmatprep.subr.mxu0 %v337
    %586 = vmatpush1.msra.mxu0 %v336
    %587 = vmatprep.subr.mxu0 0.0
    %588 = vmatpush2.msra.mxu0 0.0
    %589 = vmatprep.subr.mxu0 0.0
    %590 = vmatpush2.msra.mxu0 0.0
    %591 = vmatprep.subr.mxu0 0.0
    %592 = vmatpush2.msra.mxu0 0.0
    %593 = vmatprep.subr.mxu0 0.0
    %594 = vmatpush2.msra.mxu0 0.0
    %595 = vmatprep.subr.mxu0 0.0
    %596 = vmatpush2.msra.mxu0 0.0
    %597 = vmatprep.subr.mxu0 0.0
    %598 = vmatpush2.msra.mxu0 0.0
    %599 = vmatprep.subr.mxu0 0.0
    %600 = vmatpush2.msra.mxu0 0.0
    %601 = vmatprep.subr.mxu0 0.0
    %602 = vmatpush2.msra.mxu0 0.0
    %603 = vmatprep.subr.mxu0 0.0
    %604 = vmatpush2.msra.mxu0 0.0
    %605 = vmatprep.subr.mxu0 0.0
    %606 = vmatpush2.msra.mxu0 0.0
    %607 = vmatprep.subr.mxu0 0.0
    %608 = vmatpush2.msra.mxu0 0.0
    %609 = vmatprep.subr.mxu0 0.0
    %610 = vmatpush2.msra.mxu0 0.0
    %611 = vmatprep.subr.mxu0 0.0
    %612 = vmatpush2.msra.mxu0 0.0
    %613 = vmatprep.subr.mxu0 0.0
    %614 = vmatpush2.msra.mxu0 0.0
    %615 = vmatprep.subr.mxu0 0.0
    %616 = vmatpush2.msra.mxu0 0.0
    %617 = vmatprep.subr.mxu0 0.0
    %618 = vmatpush2.msra.mxu0 0.0
    %619 = vmatprep.mubr.f32.mxu0 0.0
    %620 = vmatmul.mubr.f32.gmra.mxu0 %v553
    %v621 = vpop.f32.mrf.mxu0
    %v622 = vadd.f32 0.0, %v621
    %v623 = vpop.f32.mrf.mxu0
    %v624 = vadd.f32 0.0, %v623
    %625 = vdwg.mxu0
    %626 = vmatprep.subr.mxu0 0.0
    %627 = vmatpush1.msra.mxu0 %v383
    %628 = vmatprep.subr.mxu0 0.0
    %629 = vmatpush1.msra.mxu0 %v380
    %630 = vmatprep.subr.mxu0 0.0
    %631 = vmatpush1.msra.mxu0 %v377
    %632 = vmatprep.subr.mxu0 0.0
    %633 = vmatpush1.msra.mxu0 %v374
    %634 = vmatprep.subr.mxu0 0.0
    %635 = vmatpush1.msra.mxu0 %v371
    %636 = vmatprep.subr.mxu0 0.0
    %637 = vmatpush1.msra.mxu0 %v368
    %638 = vmatprep.subr.mxu0 0.0
    %639 = vmatpush1.msra.mxu0 %v365
    %640 = vmatprep.subr.mxu0 0.0
    %641 = vmatpush1.msra.mxu0 %v362
    %642 = vmatprep.subr.mxu0 0.0
    %643 = vmatpush1.msra.mxu0 %v359
    %644 = vmatprep.subr.mxu0 0.0
    %645 = vmatpush1.msra.mxu0 %v356
    %646 = vmatprep.subr.mxu0 0.0
    %647 = vmatpush1.msra.mxu0 %v353
    %648 = vmatprep.subr.mxu0 0.0
    %649 = vmatpush1.msra.mxu0 %v350
    %650 = vmatprep.subr.mxu0 0.0
    %651 = vmatpush1.msra.mxu0 %v347
    %652 = vmatprep.subr.mxu0 0.0
    %653 = vmatpush1.msra.mxu0 %v344
    %654 = vmatprep.subr.mxu0 0.0
    %655 = vmatpush1.msra.mxu0 %v341
    %656 = vmatprep.subr.mxu0 0.0
    %657 = vmatpush1.msra.mxu0 %v338
    %658 = vmatprep.subr.mxu0 0.0
    %659 = vmatpush2.msra.mxu0 0.0
    %660 = vmatprep.subr.mxu0 0.0
    %661 = vmatpush2.msra.mxu0 0.0
    %662 = vmatprep.subr.mxu0 0.0
    %663 = vmatpush2.msra.mxu0 0.0
    %664 = vmatprep.subr.mxu0 0.0
    %665 = vmatpush2.msra.mxu0 0.0
    %666 = vmatprep.subr.mxu0 0.0
    %667 = vmatpush2.msra.mxu0 0.0
    %668 = vmatprep.subr.mxu0 0.0
    %669 = vmatpush2.msra.mxu0 0.0
    %670 = vmatprep.subr.mxu0 0.0
    %671 = vmatpush2.msra.mxu0 0.0
    %672 = vmatprep.subr.mxu0 0.0
    %673 = vmatpush2.msra.mxu0 0.0
    %674 = vmatprep.subr.mxu0 0.0
    %675 = vmatpush2.msra.mxu0 0.0
    %676 = vmatprep.subr.mxu0 0.0
    %677 = vmatpush2.msra.mxu0 0.0
    %678 = vmatprep.subr.mxu0 0.0
    %679 = vmatpush2.msra.mxu0 0.0
    %680 = vmatprep.subr.mxu0 0.0
    %681 = vmatpush2.msra.mxu0 0.0
    %682 = vmatprep.subr.mxu0 0.0
    %683 = vmatpush2.msra.mxu0 0.0
    %684 = vmatprep.subr.mxu0 0.0
    %685 = vmatpush2.msra.mxu0 0.0
    %686 = vmatprep.subr.mxu0 0.0
    %687 = vmatpush2.msra.mxu0 0.0
    %688 = vmatprep.subr.mxu0 0.0
    %689 = vmatpush2.msra.mxu0 0.0
    %690 = vmatprep.mubr.f32.mxu0 0.0
    %691 = vmatmul.mubr.f32.gmra.mxu0 %v553
    %v692 = vpop.f32.mrf.mxu0
    %v693 = vadd.f32 0.0, %v692
    %v694 = vpop.f32.mrf.mxu0
    %695 = vdwg.mxu0
    %v696 = vadd.f32 %v191, %v622
    %v697 = vxor.u32 %v696, 2147483648
    %v698 = vmul.f32 %v697, 1.442695
    %v699 = vpow.pop %v698
    %v700 = vadd.f32 %v699, 1.0
    %v701 = vrcp.pop %v700
    %v702 = vmul.f32 1.0, %v701
    %v703 = vadd.f32 %v193, %v624
    %v704 = vxor.u32 %v703, 2147483648
    %v705 = vmul.f32 %v704, 1.442695
    %v706 = vpow.pop %v705
    %v707 = vadd.f32 %v706, 1.0
    %v708 = vrcp.pop %v707
    %v709 = vmul.f32 1.0, %v708
    %v710 = vadd.f32 %v693, %v545
    %v711 = vmul.f32 %v702, %v710
    %v712 = vadd.f32 %v303, %v711
    %v713 = vtanh.pop %v712
    %v714 = vsub.f32 %v553, %v713
    %v715 = vmul.f32 %v709, %v714
    %v716 = vadd.f32 %v713, %v715
    %s717 = scalar_lea.vmem [#allocation9], 8
    %718 = vst [vmem:[%s717] sm:$0xff] %v716
    %719 = vmatprep.subr.mxu0 %v382
    %720 = vmatpush1.msra.mxu0 %v381
    %721 = vmatprep.subr.mxu0 %v379
    %722 = vmatpush1.msra.mxu0 %v378
    %723 = vmatprep.subr.mxu0 %v376
    %724 = vmatpush1.msra.mxu0 %v375
    %725 = vmatprep.subr.mxu0 %v373
    %726 = vmatpush1.msra.mxu0 %v372
    %727 = vmatprep.subr.mxu0 %v370
    %728 = vmatpush1.msra.mxu0 %v369
    %729 = vmatprep.subr.mxu0 %v367
    %730 = vmatpush1.msra.mxu0 %v366
    %731 = vmatprep.subr.mxu0 %v364
    %732 = vmatpush1.msra.mxu0 %v363
    %733 = vmatprep.subr.mxu0 %v361
    %734 = vmatpush1.msra.mxu0 %v360
    %735 = vmatprep.subr.mxu0 %v358
    %736 = vmatpush1.msra.mxu0 %v357
    %737 = vmatprep.subr.mxu0 %v355
    %738 = vmatpush1.msra.mxu0 %v354
    %739 = vmatprep.subr.mxu0 %v352
    %740 = vmatpush1.msra.mxu0 %v351
    %741 = vmatprep.subr.mxu0 %v349
    %742 = vmatpush1.msra.mxu0 %v348
    %743 = vmatprep.subr.mxu0 %v346
    %744 = vmatpush1.msra.mxu0 %v345
    %745 = vmatprep.subr.mxu0 %v343
    %746 = vmatpush1.msra.mxu0 %v342
    %747 = vmatprep.subr.mxu0 %v340
    %748 = vmatpush1.msra.mxu0 %v339
    %749 = vmatprep.subr.mxu0 %v337
    %750 = vmatpush1.msra.mxu0 %v336
    %751 = vmatprep.subr.mxu0 0.0
    %752 = vmatpush2.msra.mxu0 0.0
    %753 = vmatprep.subr.mxu0 0.0
    %754 = vmatpush2.msra.mxu0 0.0
    %755 = vmatprep.subr.mxu0 0.0
    %756 = vmatpush2.msra.mxu0 0.0
    %757 = vmatprep.subr.mxu0 0.0
    %758 = vmatpush2.msra.mxu0 0.0
    %759 = vmatprep.subr.mxu0 0.0
    %760 = vmatpush2.msra.mxu0 0.0
    %761 = vmatprep.subr.mxu0 0.0
    %762 = vmatpush2.msra.mxu0 0.0
    %763 = vmatprep.subr.mxu0 0.0
    %764 = vmatpush2.msra.mxu0 0.0
    %765 = vmatprep.subr.mxu0 0.0
    %766 = vmatpush2.msra.mxu0 0.0
    %767 = vmatprep.subr.mxu0 0.0
    %768 = vmatpush2.msra.mxu0 0.0
    %769 = vmatprep.subr.mxu0 0.0
    %770 = vmatpush2.msra.mxu0 0.0
    %771 = vmatprep.subr.mxu0 0.0
    %772 = vmatpush2.msra.mxu0 0.0
    %773 = vmatprep.subr.mxu0 0.0
    %774 = vmatpush2.msra.mxu0 0.0
    %775 = vmatprep.subr.mxu0 0.0
    %776 = vmatpush2.msra.mxu0 0.0
    %777 = vmatprep.subr.mxu0 0.0
    %778 = vmatpush2.msra.mxu0 0.0
    %779 = vmatprep.subr.mxu0 0.0
    %780 = vmatpush2.msra.mxu0 0.0
    %781 = vmatprep.subr.mxu0 0.0
    %782 = vmatpush2.msra.mxu0 0.0
    %783 = vmatprep.mubr.f32.mxu0 0.0
    %784 = vmatmul.mubr.f32.gmra.mxu0 %v716
    %v785 = vpop.f32.mrf.mxu0
    %v786 = vadd.f32 0.0, %v785
    %v787 = vpop.f32.mrf.mxu0
    %v788 = vadd.f32 0.0, %v787
    %789 = vdwg.mxu0
    %790 = vmatprep.subr.mxu0 0.0
    %791 = vmatpush1.msra.mxu0 %v383
    %792 = vmatprep.subr.mxu0 0.0
    %793 = vmatpush1.msra.mxu0 %v380
    %794 = vmatprep.subr.mxu0 0.0
    %795 = vmatpush1.msra.mxu0 %v377
    %796 = vmatprep.subr.mxu0 0.0
    %797 = vmatpush1.msra.mxu0 %v374
    %798 = vmatprep.subr.mxu0 0.0
    %799 = vmatpush1.msra.mxu0 %v371
    %800 = vmatprep.subr.mxu0 0.0
    %801 = vmatpush1.msra.mxu0 %v368
    %802 = vmatprep.subr.mxu0 0.0
    %803 = vmatpush1.msra.mxu0 %v365
    %804 = vmatprep.subr.mxu0 0.0
    %805 = vmatpush1.msra.mxu0 %v362
    %806 = vmatprep.subr.mxu0 0.0
    %807 = vmatpush1.msra.mxu0 %v359
    %808 = vmatprep.subr.mxu0 0.0
    %809 = vmatpush1.msra.mxu0 %v356
    %810 = vmatprep.subr.mxu0 0.0
    %811 = vmatpush1.msra.mxu0 %v353
    %812 = vmatprep.subr.mxu0 0.0
    %813 = vmatpush1.msra.mxu0 %v350
    %814 = vmatprep.subr.mxu0 0.0
    %815 = vmatpush1.msra.mxu0 %v347
    %816 = vmatprep.subr.mxu0 0.0
    %817 = vmatpush1.msra.mxu0 %v344
    %818 = vmatprep.subr.mxu0 0.0
    %819 = vmatpush1.msra.mxu0 %v341
    %820 = vmatprep.subr.mxu0 0.0
    %821 = vmatpush1.msra.mxu0 %v338
    %822 = vmatprep.subr.mxu0 0.0
    %823 = vmatpush2.msra.mxu0 0.0
    %824 = vmatprep.subr.mxu0 0.0
    %825 = vmatpush2.msra.mxu0 0.0
    %826 = vmatprep.subr.mxu0 0.0
    %827 = vmatpush2.msra.mxu0 0.0
    %828 = vmatprep.subr.mxu0 0.0
    %829 = vmatpush2.msra.mxu0 0.0
    %830 = vmatprep.subr.mxu0 0.0
    %831 = vmatpush2.msra.mxu0 0.0
    %832 = vmatprep.subr.mxu0 0.0
    %833 = vmatpush2.msra.mxu0 0.0
    %834 = vmatprep.subr.mxu0 0.0
    %835 = vmatpush2.msra.mxu0 0.0
    %836 = vmatprep.subr.mxu0 0.0
    %837 = vmatpush2.msra.mxu0 0.0
    %838 = vmatprep.subr.mxu0 0.0
    %839 = vmatpush2.msra.mxu0 0.0
    %840 = vmatprep.subr.mxu0 0.0
    %841 = vmatpush2.msra.mxu0 0.0
    %842 = vmatprep.subr.mxu0 0.0
    %843 = vmatpush2.msra.mxu0 0.0
    %844 = vmatprep.subr.mxu0 0.0
    %845 = vmatpush2.msra.mxu0 0.0
    %846 = vmatprep.subr.mxu0 0.0
    %847 = vmatpush2.msra.mxu0 0.0
    %848 = vmatprep.subr.mxu0 0.0
    %849 = vmatpush2.msra.mxu0 0.0
    %850 = vmatprep.subr.mxu0 0.0
    %851 = vmatpush2.msra.mxu0 0.0
    %852 = vmatprep.subr.mxu0 0.0
    %853 = vmatpush2.msra.mxu0 0.0
    %854 = vmatprep.mubr.f32.mxu0 0.0
    %855 = vmatmul.mubr.f32.gmra.mxu0 %v716
    %v856 = vpop.f32.mrf.mxu0
    %v857 = vadd.f32 0.0, %v856
    %v858 = vpop.f32.mrf.mxu0
    %859 = vdwg.mxu0
    %v860 = vadd.f32 %v197, %v786
    %v861 = vxor.u32 %v860, 2147483648
    %v862 = vmul.f32 %v861, 1.442695
    %v863 = vpow.pop %v862
    %v864 = vadd.f32 %v863, 1.0
    %v865 = vrcp.pop %v864
    %v866 = vmul.f32 1.0, %v865
    %v867 = vadd.f32 %v199, %v788
    %v868 = vxor.u32 %v867, 2147483648
    %v869 = vmul.f32 %v868, 1.442695
    %v870 = vpow.pop %v869
    %v871 = vadd.f32 %v870, 1.0
    %v872 = vrcp.pop %v871
    %v873 = vmul.f32 1.0, %v872
    %v874 = vadd.f32 %v857, %v545
    %v875 = vmul.f32 %v866, %v874
    %v876 = vadd.f32 %v308, %v875
    %v877 = vtanh.pop %v876
    %v878 = vsub.f32 %v716, %v877
    %v879 = vmul.f32 %v873, %v878
    %v880 = vadd.f32 %v877, %v879
    %s881 = scalar_lea.vmem [#allocation9], 16
    %882 = vst [vmem:[%s881] sm:$0xff] %v880
    %883 = vmatprep.subr.mxu0 %v382
    %884 = vmatpush1.msra.mxu0 %v381
    %885 = vmatprep.subr.mxu0 %v379
    %886 = vmatpush1.msra.mxu0 %v378
    %887 = vmatprep.subr.mxu0 %v376
    %888 = vmatpush1.msra.mxu0 %v375
    %889 = vmatprep.subr.mxu0 %v373
    %890 = vmatpush1.msra.mxu0 %v372
    %891 = vmatprep.subr.mxu0 %v370
    %892 = vmatpush1.msra.mxu0 %v369
    %893 = vmatprep.subr.mxu0 %v367
    %894 = vmatpush1.msra.mxu0 %v366
    %895 = vmatprep.subr.mxu0 %v364
    %896 = vmatpush1.msra.mxu0 %v363
    %897 = vmatprep.subr.mxu0 %v361
    %898 = vmatpush1.msra.mxu0 %v360
    %899 = vmatprep.subr.mxu0 %v358
    %900 = vmatpush1.msra.mxu0 %v357
    %901 = vmatprep.subr.mxu0 %v355
    %902 = vmatpush1.msra.mxu0 %v354
    %903 = vmatprep.subr.mxu0 %v352
    %904 = vmatpush1.msra.mxu0 %v351
    %905 = vmatprep.subr.mxu0 %v349
    %906 = vmatpush1.msra.mxu0 %v348
    %907 = vmatprep.subr.mxu0 %v346
    %908 = vmatpush1.msra.mxu0 %v345
    %909 = vmatprep.subr.mxu0 %v343
    %910 = vmatpush1.msra.mxu0 %v342
    %911 = vmatprep.subr.mxu0 %v340
    %912 = vmatpush1.msra.mxu0 %v339
    %913 = vmatprep.subr.mxu0 %v337
    %914 = vmatpush1.msra.mxu0 %v336
    %915 = vmatprep.subr.mxu0 0.0
    %916 = vmatpush2.msra.mxu0 0.0
    %917 = vmatprep.subr.mxu0 0.0
    %918 = vmatpush2.msra.mxu0 0.0
    %919 = vmatprep.subr.mxu0 0.0
    %920 = vmatpush2.msra.mxu0 0.0
    %921 = vmatprep.subr.mxu0 0.0
    %922 = vmatpush2.msra.mxu0 0.0
    %923 = vmatprep.subr.mxu0 0.0
    %924 = vmatpush2.msra.mxu0 0.0
    %925 = vmatprep.subr.mxu0 0.0
    %926 = vmatpush2.msra.mxu0 0.0
    %927 = vmatprep.subr.mxu0 0.0
    %928 = vmatpush2.msra.mxu0 0.0
    %929 = vmatprep.subr.mxu0 0.0
    %930 = vmatpush2.msra.mxu0 0.0
    %931 = vmatprep.subr.mxu0 0.0
    %932 = vmatpush2.msra.mxu0 0.0
    %933 = vmatprep.subr.mxu0 0.0
    %934 = vmatpush2.msra.mxu0 0.0
    %935 = vmatprep.subr.mxu0 0.0
    %936 = vmatpush2.msra.mxu0 0.0
    %937 = vmatprep.subr.mxu0 0.0
    %938 = vmatpush2.msra.mxu0 0.0
    %939 = vmatprep.subr.mxu0 0.0
    %940 = vmatpush2.msra.mxu0 0.0
    %941 = vmatprep.subr.mxu0 0.0
    %942 = vmatpush2.msra.mxu0 0.0
    %943 = vmatprep.subr.mxu0 0.0
    %944 = vmatpush2.msra.mxu0 0.0
    %945 = vmatprep.subr.mxu0 0.0
    %946 = vmatpush2.msra.mxu0 0.0
    %947 = vmatprep.mubr.f32.mxu0 0.0
    %948 = vmatmul.mubr.f32.gmra.mxu0 %v880
    %v949 = vpop.f32.mrf.mxu0
    %v950 = vadd.f32 0.0, %v949
    %v951 = vpop.f32.mrf.mxu0
    %v952 = vadd.f32 0.0, %v951
    %953 = vdwg.mxu0
    %954 = vmatprep.subr.mxu0 0.0
    %955 = vmatpush1.msra.mxu0 %v383
    %956 = vmatprep.subr.mxu0 0.0
    %957 = vmatpush1.msra.mxu0 %v380
    %958 = vmatprep.subr.mxu0 0.0
    %959 = vmatpush1.msra.mxu0 %v377
    %960 = vmatprep.subr.mxu0 0.0
    %961 = vmatpush1.msra.mxu0 %v374
    %962 = vmatprep.subr.mxu0 0.0
    %963 = vmatpush1.msra.mxu0 %v371
    %964 = vmatprep.subr.mxu0 0.0
    %965 = vmatpush1.msra.mxu0 %v368
    %966 = vmatprep.subr.mxu0 0.0
    %967 = vmatpush1.msra.mxu0 %v365
    %968 = vmatprep.subr.mxu0 0.0
    %969 = vmatpush1.msra.mxu0 %v362
    %970 = vmatprep.subr.mxu0 0.0
    %971 = vmatpush1.msra.mxu0 %v359
    %972 = vmatprep.subr.mxu0 0.0
    %973 = vmatpush1.msra.mxu0 %v356
    %974 = vmatprep.subr.mxu0 0.0
    %975 = vmatpush1.msra.mxu0 %v353
    %976 = vmatprep.subr.mxu0 0.0
    %977 = vmatpush1.msra.mxu0 %v350
    %978 = vmatprep.subr.mxu0 0.0
    %979 = vmatpush1.msra.mxu0 %v347
    %980 = vmatprep.subr.mxu0 0.0
    %981 = vmatpush1.msra.mxu0 %v344
    %982 = vmatprep.subr.mxu0 0.0
    %983 = vmatpush1.msra.mxu0 %v341
    %984 = vmatprep.subr.mxu0 0.0
    %985 = vmatpush1.msra.mxu0 %v338
    %986 = vmatprep.subr.mxu0 0.0
    %987 = vmatpush2.msra.mxu0 0.0
    %988 = vmatprep.subr.mxu0 0.0
    %989 = vmatpush2.msra.mxu0 0.0
    %990 = vmatprep.subr.mxu0 0.0
    %991 = vmatpush2.msra.mxu0 0.0
    %992 = vmatprep.subr.mxu0 0.0
    %993 = vmatpush2.msra.mxu0 0.0
    %994 = vmatprep.subr.mxu0 0.0
    %995 = vmatpush2.msra.mxu0 0.0
    %996 = vmatprep.subr.mxu0 0.0
    %997 = vmatpush2.msra.mxu0 0.0
    %998 = vmatprep.subr.mxu0 0.0
    %999 = vmatpush2.msra.mxu0 0.0
    %1000 = vmatprep.subr.mxu0 0.0
    %1001 = vmatpush2.msra.mxu0 0.0
    %1002 = vmatprep.subr.mxu0 0.0
    %1003 = vmatpush2.msra.mxu0 0.0
    %1004 = vmatprep.subr.mxu0 0.0
    %1005 = vmatpush2.msra.mxu0 0.0
    %1006 = vmatprep.subr.mxu0 0.0
    %1007 = vmatpush2.msra.mxu0 0.0
    %1008 = vmatprep.subr.mxu0 0.0
    %1009 = vmatpush2.msra.mxu0 0.0
    %1010 = vmatprep.subr.mxu0 0.0
    %1011 = vmatpush2.msra.mxu0 0.0
    %1012 = vmatprep.subr.mxu0 0.0
    %1013 = vmatpush2.msra.mxu0 0.0
    %1014 = vmatprep.subr.mxu0 0.0
    %1015 = vmatpush2.msra.mxu0 0.0
    %1016 = vmatprep.subr.mxu0 0.0
    %1017 = vmatpush2.msra.mxu0 0.0
    %1018 = vmatprep.mubr.f32.mxu0 0.0
    %1019 = vmatmul.mubr.f32.gmra.mxu0 %v880
    %v1020 = vpop.f32.mrf.mxu0
    %v1021 = vadd.f32 0.0, %v1020
    %v1022 = vpop.f32.mrf.mxu0
    %1023 = vdwg.mxu0
    %v1024 = vadd.f32 %v203, %v950
    %v1025 = vxor.u32 %v1024, 2147483648
    %v1026 = vmul.f32 %v1025, 1.442695
    %v1027 = vpow.pop %v1026
    %v1028 = vadd.f32 %v1027, 1.0
    %v1029 = vrcp.pop %v1028
    %v1030 = vmul.f32 1.0, %v1029
    %v1031 = vadd.f32 %v205, %v952
    %v1032 = vxor.u32 %v1031, 2147483648
    %v1033 = vmul.f32 %v1032, 1.442695
    %v1034 = vpow.pop %v1033
    %v1035 = vadd.f32 %v1034, 1.0
    %v1036 = vrcp.pop %v1035
    %v1037 = vmul.f32 1.0, %v1036
    %v1038 = vadd.f32 %v1021, %v545
    %v1039 = vmul.f32 %v1030, %v1038
    %v1040 = vadd.f32 %v313, %v1039
    %v1041 = vtanh.pop %v1040
    %v1042 = vsub.f32 %v880, %v1041
    %v1043 = vmul.f32 %v1037, %v1042
    %v1044 = vadd.f32 %v1041, %v1043
    %s1045 = scalar_lea.vmem [#allocation9], 24
    %1046 = vst [vmem:[%s1045] sm:$0xff] %v1044
    %1047 = vmatprep.subr.mxu0 %v382
    %1048 = vmatpush1.msra.mxu0 %v381
    %1049 = vmatprep.subr.mxu0 %v379
    %1050 = vmatpush1.msra.mxu0 %v378
    %1051 = vmatprep.subr.mxu0 %v376
    %1052 = vmatpush1.msra.mxu0 %v375
    %1053 = vmatprep.subr.mxu0 %v373
    %1054 = vmatpush1.msra.mxu0 %v372
    %1055 = vmatprep.subr.mxu0 %v370
    %1056 = vmatpush1.msra.mxu0 %v369
    %1057 = vmatprep.subr.mxu0 %v367
    %1058 = vmatpush1.msra.mxu0 %v366
    %1059 = vmatprep.subr.mxu0 %v364
    %1060 = vmatpush1.msra.mxu0 %v363
    %1061 = vmatprep.subr.mxu0 %v361
    %1062 = vmatpush1.msra.mxu0 %v360
    %1063 = vmatprep.subr.mxu0 %v358
    %1064 = vmatpush1.msra.mxu0 %v357
    %1065 = vmatprep.subr.mxu0 %v355
    %1066 = vmatpush1.msra.mxu0 %v354
    %1067 = vmatprep.subr.mxu0 %v352
    %1068 = vmatpush1.msra.mxu0 %v351
    %1069 = vmatprep.subr.mxu0 %v349
    %1070 = vmatpush1.msra.mxu0 %v348
    %1071 = vmatprep.subr.mxu0 %v346
    %1072 = vmatpush1.msra.mxu0 %v345
    %1073 = vmatprep.subr.mxu0 %v343
    %1074 = vmatpush1.msra.mxu0 %v342
    %1075 = vmatprep.subr.mxu0 %v340
    %1076 = vmatpush1.msra.mxu0 %v339
    %1077 = vmatprep.subr.mxu0 %v337
    %1078 = vmatpush1.msra.mxu0 %v336
    %1079 = vmatprep.subr.mxu0 0.0
    %1080 = vmatpush2.msra.mxu0 0.0
    %1081 = vmatprep.subr.mxu0 0.0
    %1082 = vmatpush2.msra.mxu0 0.0
    %1083 = vmatprep.subr.mxu0 0.0
    %1084 = vmatpush2.msra.mxu0 0.0
    %1085 = vmatprep.subr.mxu0 0.0
    %1086 = vmatpush2.msra.mxu0 0.0
    %1087 = vmatprep.subr.mxu0 0.0
    %1088 = vmatpush2.msra.mxu0 0.0
    %1089 = vmatprep.subr.mxu0 0.0
    %1090 = vmatpush2.msra.mxu0 0.0
    %1091 = vmatprep.subr.mxu0 0.0
    %1092 = vmatpush2.msra.mxu0 0.0
    %1093 = vmatprep.subr.mxu0 0.0
    %1094 = vmatpush2.msra.mxu0 0.0
    %1095 = vmatprep.subr.mxu0 0.0
    %1096 = vmatpush2.msra.mxu0 0.0
    %1097 = vmatprep.subr.mxu0 0.0
    %1098 = vmatpush2.msra.mxu0 0.0
    %1099 = vmatprep.subr.mxu0 0.0
    %1100 = vmatpush2.msra.mxu0 0.0
    %1101 = vmatprep.subr.mxu0 0.0
    %1102 = vmatpush2.msra.mxu0 0.0
    %1103 = vmatprep.subr.mxu0 0.0
    %1104 = vmatpush2.msra.mxu0 0.0
    %1105 = vmatprep.subr.mxu0 0.0
    %1106 = vmatpush2.msra.mxu0 0.0
    %1107 = vmatprep.subr.mxu0 0.0
    %1108 = vmatpush2.msra.mxu0 0.0
    %1109 = vmatprep.subr.mxu0 0.0
    %1110 = vmatpush2.msra.mxu0 0.0
    %1111 = vmatprep.mubr.f32.mxu0 0.0
    %1112 = vmatmul.mubr.f32.gmra.mxu0 %v1044
    %v1113 = vpop.f32.mrf.mxu0
    %v1114 = vadd.f32 0.0, %v1113
    %v1115 = vpop.f32.mrf.mxu0
    %v1116 = vadd.f32 0.0, %v1115
    %1117 = vdwg.mxu0
    %1118 = vmatprep.subr.mxu0 0.0
    %1119 = vmatpush1.msra.mxu0 %v383
    %1120 = vmatprep.subr.mxu0 0.0
    %1121 = vmatpush1.msra.mxu0 %v380
    %1122 = vmatprep.subr.mxu0 0.0
    %1123 = vmatpush1.msra.mxu0 %v377
    %1124 = vmatprep.subr.mxu0 0.0
    %1125 = vmatpush1.msra.mxu0 %v374
    %1126 = vmatprep.subr.mxu0 0.0
    %1127 = vmatpush1.msra.mxu0 %v371
    %1128 = vmatprep.subr.mxu0 0.0
    %1129 = vmatpush1.msra.mxu0 %v368
    %1130 = vmatprep.subr.mxu0 0.0
    %1131 = vmatpush1.msra.mxu0 %v365
    %1132 = vmatprep.subr.mxu0 0.0
    %1133 = vmatpush1.msra.mxu0 %v362
    %1134 = vmatprep.subr.mxu0 0.0
    %1135 = vmatpush1.msra.mxu0 %v359
    %1136 = vmatprep.subr.mxu0 0.0
    %1137 = vmatpush1.msra.mxu0 %v356
    %1138 = vmatprep.subr.mxu0 0.0
    %1139 = vmatpush1.msra.mxu0 %v353
    %1140 = vmatprep.subr.mxu0 0.0
    %1141 = vmatpush1.msra.mxu0 %v350
    %1142 = vmatprep.subr.mxu0 0.0
    %1143 = vmatpush1.msra.mxu0 %v347
    %1144 = vmatprep.subr.mxu0 0.0
    %1145 = vmatpush1.msra.mxu0 %v344
    %1146 = vmatprep.subr.mxu0 0.0
    %1147 = vmatpush1.msra.mxu0 %v341
    %1148 = vmatprep.subr.mxu0 0.0
    %1149 = vmatpush1.msra.mxu0 %v338
    %1150 = vmatprep.subr.mxu0 0.0
    %1151 = vmatpush2.msra.mxu0 0.0
    %1152 = vmatprep.subr.mxu0 0.0
    %1153 = vmatpush2.msra.mxu0 0.0
    %1154 = vmatprep.subr.mxu0 0.0
    %1155 = vmatpush2.msra.mxu0 0.0
    %1156 = vmatprep.subr.mxu0 0.0
    %1157 = vmatpush2.msra.mxu0 0.0
    %1158 = vmatprep.subr.mxu0 0.0
    %1159 = vmatpush2.msra.mxu0 0.0
    %1160 = vmatprep.subr.mxu0 0.0
    %1161 = vmatpush2.msra.mxu0 0.0
    %1162 = vmatprep.subr.mxu0 0.0
    %1163 = vmatpush2.msra.mxu0 0.0
    %1164 = vmatprep.subr.mxu0 0.0
    %1165 = vmatpush2.msra.mxu0 0.0
    %1166 = vmatprep.subr.mxu0 0.0
    %1167 = vmatpush2.msra.mxu0 0.0
    %1168 = vmatprep.subr.mxu0 0.0
    %1169 = vmatpush2.msra.mxu0 0.0
    %1170 = vmatprep.subr.mxu0 0.0
    %1171 = vmatpush2.msra.mxu0 0.0
    %1172 = vmatprep.subr.mxu0 0.0
    %1173 = vmatpush2.msra.mxu0 0.0
    %1174 = vmatprep.subr.mxu0 0.0
    %1175 = vmatpush2.msra.mxu0 0.0
    %1176 = vmatprep.subr.mxu0 0.0
    %1177 = vmatpush2.msra.mxu0 0.0
    %1178 = vmatprep.subr.mxu0 0.0
    %1179 = vmatpush2.msra.mxu0 0.0
    %1180 = vmatprep.subr.mxu0 0.0
    %1181 = vmatpush2.msra.mxu0 0.0
    %1182 = vmatprep.mubr.f32.mxu0 0.0
    %1183 = vmatmul.mubr.f32.gmra.mxu0 %v1044
    %v1184 = vpop.f32.mrf.mxu0
    %v1185 = vadd.f32 0.0, %v1184
    %v1186 = vpop.f32.mrf.mxu0
    %1187 = vdwg.mxu0
    %v1188 = vadd.f32 %v209, %v1114
    %v1189 = vxor.u32 %v1188, 2147483648
    %v1190 = vmul.f32 %v1189, 1.442695
    %v1191 = vpow.pop %v1190
    %v1192 = vadd.f32 %v1191, 1.0
    %v1193 = vrcp.pop %v1192
    %v1194 = vmul.f32 1.0, %v1193
    %v1195 = vadd.f32 %v211, %v1116
    %v1196 = vxor.u32 %v1195, 2147483648
    %v1197 = vmul.f32 %v1196, 1.442695
    %v1198 = vpow.pop %v1197
    %v1199 = vadd.f32 %v1198, 1.0
    %v1200 = vrcp.pop %v1199
    %v1201 = vmul.f32 1.0, %v1200
    %v1202 = vadd.f32 %v1185, %v545
    %v1203 = vmul.f32 %v1194, %v1202
    %v1204 = vadd.f32 %v318, %v1203
    %v1205 = vtanh.pop %v1204
    %v1206 = vsub.f32 %v1044, %v1205
    %v1207 = vmul.f32 %v1201, %v1206
    %v1208 = vadd.f32 %v1205, %v1207
    %s1209 = scalar_lea.vmem [#allocation9], 32
    %1210 = vst [vmem:[%s1209] sm:$0xff] %v1208
    %1211 = vmatprep.subr.mxu0 %v382
    %1212 = vmatpush1.msra.mxu0 %v381
    %1213 = vmatprep.subr.mxu0 %v379
    %1214 = vmatpush1.msra.mxu0 %v378
    %1215 = vmatprep.subr.mxu0 %v376
    %1216 = vmatpush1.msra.mxu0 %v375
    %1217 = vmatprep.subr.mxu0 %v373
    %1218 = vmatpush1.msra.mxu0 %v372
    %1219 = vmatprep.subr.mxu0 %v370
    %1220 = vmatpush1.msra.mxu0 %v369
    %1221 = vmatprep.subr.mxu0 %v367
    %1222 = vmatpush1.msra.mxu0 %v366
    %1223 = vmatprep.subr.mxu0 %v364
    %1224 = vmatpush1.msra.mxu0 %v363
    %1225 = vmatprep.subr.mxu0 %v361
    %1226 = vmatpush1.msra.mxu0 %v360
    %1227 = vmatprep.subr.mxu0 %v358
    %1228 = vmatpush1.msra.mxu0 %v357
    %1229 = vmatprep.subr.mxu0 %v355
    %1230 = vmatpush1.msra.mxu0 %v354
    %1231 = vmatprep.subr.mxu0 %v352
    %1232 = vmatpush1.msra.mxu0 %v351
    %1233 = vmatprep.subr.mxu0 %v349
    %1234 = vmatpush1.msra.mxu0 %v348
    %1235 = vmatprep.subr.mxu0 %v346
    %1236 = vmatpush1.msra.mxu0 %v345
    %1237 = vmatprep.subr.mxu0 %v343
    %1238 = vmatpush1.msra.mxu0 %v342
    %1239 = vmatprep.subr.mxu0 %v340
    %1240 = vmatpush1.msra.mxu0 %v339
    %1241 = vmatprep.subr.mxu0 %v337
    %1242 = vmatpush1.msra.mxu0 %v336
    %1243 = vmatprep.subr.mxu0 0.0
    %1244 = vmatpush2.msra.mxu0 0.0
    %1245 = vmatprep.subr.mxu0 0.0
    %1246 = vmatpush2.msra.mxu0 0.0
    %1247 = vmatprep.subr.mxu0 0.0
    %1248 = vmatpush2.msra.mxu0 0.0
    %1249 = vmatprep.subr.mxu0 0.0
    %1250 = vmatpush2.msra.mxu0 0.0
    %1251 = vmatprep.subr.mxu0 0.0
    %1252 = vmatpush2.msra.mxu0 0.0
    %1253 = vmatprep.subr.mxu0 0.0
    %1254 = vmatpush2.msra.mxu0 0.0
    %1255 = vmatprep.subr.mxu0 0.0
    %1256 = vmatpush2.msra.mxu0 0.0
    %1257 = vmatprep.subr.mxu0 0.0
    %1258 = vmatpush2.msra.mxu0 0.0
    %1259 = vmatprep.subr.mxu0 0.0
    %1260 = vmatpush2.msra.mxu0 0.0
    %1261 = vmatprep.subr.mxu0 0.0
    %1262 = vmatpush2.msra.mxu0 0.0
    %1263 = vmatprep.subr.mxu0 0.0
    %1264 = vmatpush2.msra.mxu0 0.0
    %1265 = vmatprep.subr.mxu0 0.0
    %1266 = vmatpush2.msra.mxu0 0.0
    %1267 = vmatprep.subr.mxu0 0.0
    %1268 = vmatpush2.msra.mxu0 0.0
    %1269 = vmatprep.subr.mxu0 0.0
    %1270 = vmatpush2.msra.mxu0 0.0
    %1271 = vmatprep.subr.mxu0 0.0
    %1272 = vmatpush2.msra.mxu0 0.0
    %1273 = vmatprep.subr.mxu0 0.0
    %1274 = vmatpush2.msra.mxu0 0.0
    %1275 = vmatprep.mubr.f32.mxu0 0.0
    %1276 = vmatmul.mubr.f32.gmra.mxu0 %v1208
    %v1277 = vpop.f32.mrf.mxu0
    %v1278 = vadd.f32 0.0, %v1277
    %v1279 = vpop.f32.mrf.mxu0
    %v1280 = vadd.f32 0.0, %v1279
    %1281 = vdwg.mxu0
    %1282 = vmatprep.subr.mxu0 0.0
    %1283 = vmatpush1.msra.mxu0 %v383
    %1284 = vmatprep.subr.mxu0 0.0
    %1285 = vmatpush1.msra.mxu0 %v380
    %1286 = vmatprep.subr.mxu0 0.0
    %1287 = vmatpush1.msra.mxu0 %v377
    %1288 = vmatprep.subr.mxu0 0.0
    %1289 = vmatpush1.msra.mxu0 %v374
    %1290 = vmatprep.subr.mxu0 0.0
    %1291 = vmatpush1.msra.mxu0 %v371
    %1292 = vmatprep.subr.mxu0 0.0
    %1293 = vmatpush1.msra.mxu0 %v368
    %1294 = vmatprep.subr.mxu0 0.0
    %1295 = vmatpush1.msra.mxu0 %v365
    %1296 = vmatprep.subr.mxu0 0.0
    %1297 = vmatpush1.msra.mxu0 %v362
    %1298 = vmatprep.subr.mxu0 0.0
    %1299 = vmatpush1.msra.mxu0 %v359
    %1300 = vmatprep.subr.mxu0 0.0
    %1301 = vmatpush1.msra.mxu0 %v356
    %1302 = vmatprep.subr.mxu0 0.0
    %1303 = vmatpush1.msra.mxu0 %v353
    %1304 = vmatprep.subr.mxu0 0.0
    %1305 = vmatpush1.msra.mxu0 %v350
    %1306 = vmatprep.subr.mxu0 0.0
    %1307 = vmatpush1.msra.mxu0 %v347
    %1308 = vmatprep.subr.mxu0 0.0
    %1309 = vmatpush1.msra.mxu0 %v344
    %1310 = vmatprep.subr.mxu0 0.0
    %1311 = vmatpush1.msra.mxu0 %v341
    %1312 = vmatprep.subr.mxu0 0.0
    %1313 = vmatpush1.msra.mxu0 %v338
    %1314 = vmatprep.subr.mxu0 0.0
    %1315 = vmatpush2.msra.mxu0 0.0
    %1316 = vmatprep.subr.mxu0 0.0
    %1317 = vmatpush2.msra.mxu0 0.0
    %1318 = vmatprep.subr.mxu0 0.0
    %1319 = vmatpush2.msra.mxu0 0.0
    %1320 = vmatprep.subr.mxu0 0.0
    %1321 = vmatpush2.msra.mxu0 0.0
    %1322 = vmatprep.subr.mxu0 0.0
    %1323 = vmatpush2.msra.mxu0 0.0
    %1324 = vmatprep.subr.mxu0 0.0
    %1325 = vmatpush2.msra.mxu0 0.0
    %1326 = vmatprep.subr.mxu0 0.0
    %1327 = vmatpush2.msra.mxu0 0.0
    %1328 = vmatprep.subr.mxu0 0.0
    %1329 = vmatpush2.msra.mxu0 0.0
    %1330 = vmatprep.subr.mxu0 0.0
    %1331 = vmatpush2.msra.mxu0 0.0
    %1332 = vmatprep.subr.mxu0 0.0
    %1333 = vmatpush2.msra.mxu0 0.0
    %1334 = vmatprep.subr.mxu0 0.0
    %1335 = vmatpush2.msra.mxu0 0.0
    %1336 = vmatprep.subr.mxu0 0.0
    %1337 = vmatpush2.msra.mxu0 0.0
    %1338 = vmatprep.subr.mxu0 0.0
    %1339 = vmatpush2.msra.mxu0 0.0
    %1340 = vmatprep.subr.mxu0 0.0
    %1341 = vmatpush2.msra.mxu0 0.0
    %1342 = vmatprep.subr.mxu0 0.0
    %1343 = vmatpush2.msra.mxu0 0.0
    %1344 = vmatprep.subr.mxu0 0.0
    %1345 = vmatpush2.msra.mxu0 0.0
    %1346 = vmatprep.mubr.f32.mxu0 0.0
    %1347 = vmatmul.mubr.f32.gmra.mxu0 %v1208
    %v1348 = vpop.f32.mrf.mxu0
    %v1349 = vadd.f32 0.0, %v1348
    %v1350 = vpop.f32.mrf.mxu0
    %1351 = vdwg.mxu0
    %v1352 = vadd.f32 %v215, %v1278
    %v1353 = vxor.u32 %v1352, 2147483648
    %v1354 = vmul.f32 %v1353, 1.442695
    %v1355 = vpow.pop %v1354
    %v1356 = vadd.f32 %v1355, 1.0
    %v1357 = vrcp.pop %v1356
    %v1358 = vmul.f32 1.0, %v1357
    %v1359 = vadd.f32 %v217, %v1280
    %v1360 = vxor.u32 %v1359, 2147483648
    %v1361 = vmul.f32 %v1360, 1.442695
    %v1362 = vpow.pop %v1361
    %v1363 = vadd.f32 %v1362, 1.0
    %v1364 = vrcp.pop %v1363
    %v1365 = vmul.f32 1.0, %v1364
    %v1366 = vadd.f32 %v1349, %v545
    %v1367 = vmul.f32 %v1358, %v1366
    %v1368 = vadd.f32 %v323, %v1367
    %v1369 = vtanh.pop %v1368
    %v1370 = vsub.f32 %v1208, %v1369
    %v1371 = vmul.f32 %v1365, %v1370
    %v1372 = vadd.f32 %v1369, %v1371
    %s1373 = scalar_lea.vmem [#allocation9], 40
    %1374 = vst [vmem:[%s1373] sm:$0xff] %v1372
    %1375 = vmatprep.subr.mxu0 %v382
    %1376 = vmatpush1.msra.mxu0 %v381
    %1377 = vmatprep.subr.mxu0 %v379
    %1378 = vmatpush1.msra.mxu0 %v378
    %1379 = vmatprep.subr.mxu0 %v376
    %1380 = vmatpush1.msra.mxu0 %v375
    %1381 = vmatprep.subr.mxu0 %v373
    %1382 = vmatpush1.msra.mxu0 %v372
    %1383 = vmatprep.subr.mxu0 %v370
    %1384 = vmatpush1.msra.mxu0 %v369
    %1385 = vmatprep.subr.mxu0 %v367
    %1386 = vmatpush1.msra.mxu0 %v366
    %1387 = vmatprep.subr.mxu0 %v364
    %1388 = vmatpush1.msra.mxu0 %v363
    %1389 = vmatprep.subr.mxu0 %v361
    %1390 = vmatpush1.msra.mxu0 %v360
    %1391 = vmatprep.subr.mxu0 %v358
    %1392 = vmatpush1.msra.mxu0 %v357
    %1393 = vmatprep.subr.mxu0 %v355
    %1394 = vmatpush1.msra.mxu0 %v354
    %1395 = vmatprep.subr.mxu0 %v352
    %1396 = vmatpush1.msra.mxu0 %v351
    %1397 = vmatprep.subr.mxu0 %v349
    %1398 = vmatpush1.msra.mxu0 %v348
    %1399 = vmatprep.subr.mxu0 %v346
    %1400 = vmatpush1.msra.mxu0 %v345
    %1401 = vmatprep.subr.mxu0 %v343
    %1402 = vmatpush1.msra.mxu0 %v342
    %1403 = vmatprep.subr.mxu0 %v340
    %1404 = vmatpush1.msra.mxu0 %v339
    %1405 = vmatprep.subr.mxu0 %v337
    %1406 = vmatpush1.msra.mxu0 %v336
    %1407 = vmatprep.subr.mxu0 0.0
    %1408 = vmatpush2.msra.mxu0 0.0
    %1409 = vmatprep.subr.mxu0 0.0
    %1410 = vmatpush2.msra.mxu0 0.0
    %1411 = vmatprep.subr.mxu0 0.0
    %1412 = vmatpush2.msra.mxu0 0.0
    %1413 = vmatprep.subr.mxu0 0.0
    %1414 = vmatpush2.msra.mxu0 0.0
    %1415 = vmatprep.subr.mxu0 0.0
    %1416 = vmatpush2.msra.mxu0 0.0
    %1417 = vmatprep.subr.mxu0 0.0
    %1418 = vmatpush2.msra.mxu0 0.0
    %1419 = vmatprep.subr.mxu0 0.0
    %1420 = vmatpush2.msra.mxu0 0.0
    %1421 = vmatprep.subr.mxu0 0.0
    %1422 = vmatpush2.msra.mxu0 0.0
    %1423 = vmatprep.subr.mxu0 0.0
    %1424 = vmatpush2.msra.mxu0 0.0
    %1425 = vmatprep.subr.mxu0 0.0
    %1426 = vmatpush2.msra.mxu0 0.0
    %1427 = vmatprep.subr.mxu0 0.0
    %1428 = vmatpush2.msra.mxu0 0.0
    %1429 = vmatprep.subr.mxu0 0.0
    %1430 = vmatpush2.msra.mxu0 0.0
    %1431 = vmatprep.subr.mxu0 0.0
    %1432 = vmatpush2.msra.mxu0 0.0
    %1433 = vmatprep.subr.mxu0 0.0
    %1434 = vmatpush2.msra.mxu0 0.0
    %1435 = vmatprep.subr.mxu0 0.0
    %1436 = vmatpush2.msra.mxu0 0.0
    %1437 = vmatprep.subr.mxu0 0.0
    %1438 = vmatpush2.msra.mxu0 0.0
    %1439 = vmatprep.mubr.f32.mxu0 0.0
    %1440 = vmatmul.mubr.f32.gmra.mxu0 %v1372
    %v1441 = vpop.f32.mrf.mxu0
    %v1442 = vadd.f32 0.0, %v1441
    %v1443 = vpop.f32.mrf.mxu0
    %v1444 = vadd.f32 0.0, %v1443
    %1445 = vdwg.mxu0
    %1446 = vmatprep.subr.mxu0 0.0
    %1447 = vmatpush1.msra.mxu0 %v383
    %1448 = vmatprep.subr.mxu0 0.0
    %1449 = vmatpush1.msra.mxu0 %v380
    %1450 = vmatprep.subr.mxu0 0.0
    %1451 = vmatpush1.msra.mxu0 %v377
    %1452 = vmatprep.subr.mxu0 0.0
    %1453 = vmatpush1.msra.mxu0 %v374
    %1454 = vmatprep.subr.mxu0 0.0
    %1455 = vmatpush1.msra.mxu0 %v371
    %1456 = vmatprep.subr.mxu0 0.0
    %1457 = vmatpush1.msra.mxu0 %v368
    %1458 = vmatprep.subr.mxu0 0.0
    %1459 = vmatpush1.msra.mxu0 %v365
    %1460 = vmatprep.subr.mxu0 0.0
    %1461 = vmatpush1.msra.mxu0 %v362
    %1462 = vmatprep.subr.mxu0 0.0
    %1463 = vmatpush1.msra.mxu0 %v359
    %1464 = vmatprep.subr.mxu0 0.0
    %1465 = vmatpush1.msra.mxu0 %v356
    %1466 = vmatprep.subr.mxu0 0.0
    %1467 = vmatpush1.msra.mxu0 %v353
    %1468 = vmatprep.subr.mxu0 0.0
    %1469 = vmatpush1.msra.mxu0 %v350
    %1470 = vmatprep.subr.mxu0 0.0
    %1471 = vmatpush1.msra.mxu0 %v347
    %1472 = vmatprep.subr.mxu0 0.0
    %1473 = vmatpush1.msra.mxu0 %v344
    %1474 = vmatprep.subr.mxu0 0.0
    %1475 = vmatpush1.msra.mxu0 %v341
    %1476 = vmatprep.subr.mxu0 0.0
    %1477 = vmatpush1.msra.mxu0 %v338
    %1478 = vmatprep.subr.mxu0 0.0
    %1479 = vmatpush2.msra.mxu0 0.0
    %1480 = vmatprep.subr.mxu0 0.0
    %1481 = vmatpush2.msra.mxu0 0.0
    %1482 = vmatprep.subr.mxu0 0.0
    %1483 = vmatpush2.msra.mxu0 0.0
    %1484 = vmatprep.subr.mxu0 0.0
    %1485 = vmatpush2.msra.mxu0 0.0
    %1486 = vmatprep.subr.mxu0 0.0
    %1487 = vmatpush2.msra.mxu0 0.0
    %1488 = vmatprep.subr.mxu0 0.0
    %1489 = vmatpush2.msra.mxu0 0.0
    %1490 = vmatprep.subr.mxu0 0.0
    %1491 = vmatpush2.msra.mxu0 0.0
    %1492 = vmatprep.subr.mxu0 0.0
    %1493 = vmatpush2.msra.mxu0 0.0
    %1494 = vmatprep.subr.mxu0 0.0
    %1495 = vmatpush2.msra.mxu0 0.0
    %1496 = vmatprep.subr.mxu0 0.0
    %1497 = vmatpush2.msra.mxu0 0.0
    %1498 = vmatprep.subr.mxu0 0.0
    %1499 = vmatpush2.msra.mxu0 0.0
    %1500 = vmatprep.subr.mxu0 0.0
    %1501 = vmatpush2.msra.mxu0 0.0
    %1502 = vmatprep.subr.mxu0 0.0
    %1503 = vmatpush2.msra.mxu0 0.0
    %1504 = vmatprep.subr.mxu0 0.0
    %1505 = vmatpush2.msra.mxu0 0.0
    %1506 = vmatprep.subr.mxu0 0.0
    %1507 = vmatpush2.msra.mxu0 0.0
    %1508 = vmatprep.subr.mxu0 0.0
    %1509 = vmatpush2.msra.mxu0 0.0
    %1510 = vmatprep.mubr.f32.mxu0 0.0
    %1511 = vmatmul.mubr.f32.gmra.mxu0 %v1372
    %v1512 = vpop.f32.mrf.mxu0
    %v1513 = vadd.f32 0.0, %v1512
    %v1514 = vpop.f32.mrf.mxu0
    %1515 = vdwg.mxu0
    %v1516 = vadd.f32 %v221, %v1442
    %v1517 = vxor.u32 %v1516, 2147483648
    %v1518 = vmul.f32 %v1517, 1.442695
    %v1519 = vpow.pop %v1518
    %v1520 = vadd.f32 %v1519, 1.0
    %v1521 = vrcp.pop %v1520
    %v1522 = vmul.f32 1.0, %v1521
    %v1523 = vadd.f32 %v223, %v1444
    %v1524 = vxor.u32 %v1523, 2147483648
    %v1525 = vmul.f32 %v1524, 1.442695
    %v1526 = vpow.pop %v1525
    %v1527 = vadd.f32 %v1526, 1.0
    %v1528 = vrcp.pop %v1527
    %v1529 = vmul.f32 1.0, %v1528
    %v1530 = vadd.f32 %v1513, %v545
    %v1531 = vmul.f32 %v1522, %v1530
    %v1532 = vadd.f32 %v328, %v1531
    %v1533 = vtanh.pop %v1532
    %v1534 = vsub.f32 %v1372, %v1533
    %v1535 = vmul.f32 %v1529, %v1534
    %v1536 = vadd.f32 %v1533, %v1535
    %s1537 = scalar_lea.vmem [#allocation9], 48
    %1538 = vst [vmem:[%s1537] sm:$0xff] %v1536
    %1539 = vmatprep.subr.mxu0 %v382
    %1540 = vmatpush1.msra.mxu0 %v381
    %1541 = vmatprep.subr.mxu0 %v379
    %1542 = vmatpush1.msra.mxu0 %v378
    %1543 = vmatprep.subr.mxu0 %v376
    %1544 = vmatpush1.msra.mxu0 %v375
    %1545 = vmatprep.subr.mxu0 %v373
    %1546 = vmatpush1.msra.mxu0 %v372
    %1547 = vmatprep.subr.mxu0 %v370
    %1548 = vmatpush1.msra.mxu0 %v369
    %1549 = vmatprep.subr.mxu0 %v367
    %1550 = vmatpush1.msra.mxu0 %v366
    %1551 = vmatprep.subr.mxu0 %v364
    %1552 = vmatpush1.msra.mxu0 %v363
    %1553 = vmatprep.subr.mxu0 %v361
    %1554 = vmatpush1.msra.mxu0 %v360
    %1555 = vmatprep.subr.mxu0 %v358
    %1556 = vmatpush1.msra.mxu0 %v357
    %1557 = vmatprep.subr.mxu0 %v355
    %1558 = vmatpush1.msra.mxu0 %v354
    %1559 = vmatprep.subr.mxu0 %v352
    %1560 = vmatpush1.msra.mxu0 %v351
    %1561 = vmatprep.subr.mxu0 %v349
    %1562 = vmatpush1.msra.mxu0 %v348
    %1563 = vmatprep.subr.mxu0 %v346
    %1564 = vmatpush1.msra.mxu0 %v345
    %1565 = vmatprep.subr.mxu0 %v343
    %1566 = vmatpush1.msra.mxu0 %v342
    %1567 = vmatprep.subr.mxu0 %v340
    %1568 = vmatpush1.msra.mxu0 %v339
    %1569 = vmatprep.subr.mxu0 %v337
    %1570 = vmatpush1.msra.mxu0 %v336
    %1571 = vmatprep.subr.mxu0 0.0
    %1572 = vmatpush2.msra.mxu0 0.0
    %1573 = vmatprep.subr.mxu0 0.0
    %1574 = vmatpush2.msra.mxu0 0.0
    %1575 = vmatprep.subr.mxu0 0.0
    %1576 = vmatpush2.msra.mxu0 0.0
    %1577 = vmatprep.subr.mxu0 0.0
    %1578 = vmatpush2.msra.mxu0 0.0
    %1579 = vmatprep.subr.mxu0 0.0
    %1580 = vmatpush2.msra.mxu0 0.0
    %1581 = vmatprep.subr.mxu0 0.0
    %1582 = vmatpush2.msra.mxu0 0.0
    %1583 = vmatprep.subr.mxu0 0.0
    %1584 = vmatpush2.msra.mxu0 0.0
    %1585 = vmatprep.subr.mxu0 0.0
    %1586 = vmatpush2.msra.mxu0 0.0
    %1587 = vmatprep.subr.mxu0 0.0
    %1588 = vmatpush2.msra.mxu0 0.0
    %1589 = vmatprep.subr.mxu0 0.0
    %1590 = vmatpush2.msra.mxu0 0.0
    %1591 = vmatprep.subr.mxu0 0.0
    %1592 = vmatpush2.msra.mxu0 0.0
    %1593 = vmatprep.subr.mxu0 0.0
    %1594 = vmatpush2.msra.mxu0 0.0
    %1595 = vmatprep.subr.mxu0 0.0
    %1596 = vmatpush2.msra.mxu0 0.0
    %1597 = vmatprep.subr.mxu0 0.0
    %1598 = vmatpush2.msra.mxu0 0.0
    %1599 = vmatprep.subr.mxu0 0.0
    %1600 = vmatpush2.msra.mxu0 0.0
    %1601 = vmatprep.subr.mxu0 0.0
    %1602 = vmatpush2.msra.mxu0 0.0
    %1603 = vmatprep.mubr.f32.mxu0 0.0
    %1604 = vmatmul.mubr.f32.gmra.mxu0 %v1536
    %v1605 = vpop.f32.mrf.mxu0
    %v1606 = vadd.f32 0.0, %v1605
    %v1607 = vpop.f32.mrf.mxu0
    %v1608 = vadd.f32 0.0, %v1607
    %1609 = vdwg.mxu0
    %1610 = vmatprep.subr.mxu0 0.0
    %1611 = vmatpush1.msra.mxu0 %v383
    %1612 = vmatprep.subr.mxu0 0.0
    %1613 = vmatpush1.msra.mxu0 %v380
    %1614 = vmatprep.subr.mxu0 0.0
    %1615 = vmatpush1.msra.mxu0 %v377
    %1616 = vmatprep.subr.mxu0 0.0
    %1617 = vmatpush1.msra.mxu0 %v374
    %1618 = vmatprep.subr.mxu0 0.0
    %1619 = vmatpush1.msra.mxu0 %v371
    %1620 = vmatprep.subr.mxu0 0.0
    %1621 = vmatpush1.msra.mxu0 %v368
    %1622 = vmatprep.subr.mxu0 0.0
    %1623 = vmatpush1.msra.mxu0 %v365
    %1624 = vmatprep.subr.mxu0 0.0
    %1625 = vmatpush1.msra.mxu0 %v362
    %1626 = vmatprep.subr.mxu0 0.0
    %1627 = vmatpush1.msra.mxu0 %v359
    %1628 = vmatprep.subr.mxu0 0.0
    %1629 = vmatpush1.msra.mxu0 %v356
    %1630 = vmatprep.subr.mxu0 0.0
    %1631 = vmatpush1.msra.mxu0 %v353
    %1632 = vmatprep.subr.mxu0 0.0
    %1633 = vmatpush1.msra.mxu0 %v350
    %1634 = vmatprep.subr.mxu0 0.0
    %1635 = vmatpush1.msra.mxu0 %v347
    %1636 = vmatprep.subr.mxu0 0.0
    %1637 = vmatpush1.msra.mxu0 %v344
    %1638 = vmatprep.subr.mxu0 0.0
    %1639 = vmatpush1.msra.mxu0 %v341
    %1640 = vmatprep.subr.mxu0 0.0
    %1641 = vmatpush1.msra.mxu0 %v338
    %1642 = vmatprep.subr.mxu0 0.0
    %1643 = vmatpush2.msra.mxu0 0.0
    %1644 = vmatprep.subr.mxu0 0.0
    %1645 = vmatpush2.msra.mxu0 0.0
    %1646 = vmatprep.subr.mxu0 0.0
    %1647 = vmatpush2.msra.mxu0 0.0
    %1648 = vmatprep.subr.mxu0 0.0
    %1649 = vmatpush2.msra.mxu0 0.0
    %1650 = vmatprep.subr.mxu0 0.0
    %1651 = vmatpush2.msra.mxu0 0.0
    %1652 = vmatprep.subr.mxu0 0.0
    %1653 = vmatpush2.msra.mxu0 0.0
    %1654 = vmatprep.subr.mxu0 0.0
    %1655 = vmatpush2.msra.mxu0 0.0
    %1656 = vmatprep.subr.mxu0 0.0
    %1657 = vmatpush2.msra.mxu0 0.0
    %1658 = vmatprep.subr.mxu0 0.0
    %1659 = vmatpush2.msra.mxu0 0.0
    %1660 = vmatprep.subr.mxu0 0.0
    %1661 = vmatpush2.msra.mxu0 0.0
    %1662 = vmatprep.subr.mxu0 0.0
    %1663 = vmatpush2.msra.mxu0 0.0
    %1664 = vmatprep.subr.mxu0 0.0
    %1665 = vmatpush2.msra.mxu0 0.0
    %1666 = vmatprep.subr.mxu0 0.0
    %1667 = vmatpush2.msra.mxu0 0.0
    %1668 = vmatprep.subr.mxu0 0.0
    %1669 = vmatpush2.msra.mxu0 0.0
    %1670 = vmatprep.subr.mxu0 0.0
    %1671 = vmatpush2.msra.mxu0 0.0
    %1672 = vmatprep.subr.mxu0 0.0
    %1673 = vmatpush2.msra.mxu0 0.0
    %1674 = vmatprep.mubr.f32.mxu0 0.0
    %1675 = vmatmul.mubr.f32.gmra.mxu0 %v1536
    %v1676 = vpop.f32.mrf.mxu0
    %v1677 = vadd.f32 0.0, %v1676
    %v1678 = vpop.f32.mrf.mxu0
    %1679 = vdwg.mxu0
    %v1680 = vadd.f32 %v227, %v1606
    %v1681 = vxor.u32 %v1680, 2147483648
    %v1682 = vmul.f32 %v1681, 1.442695
    %v1683 = vpow.pop %v1682
    %v1684 = vadd.f32 %v1683, 1.0
    %v1685 = vrcp.pop %v1684
    %v1686 = vmul.f32 1.0, %v1685
    %v1687 = vadd.f32 %v229, %v1608
    %v1688 = vxor.u32 %v1687, 2147483648
    %v1689 = vmul.f32 %v1688, 1.442695
    %v1690 = vpow.pop %v1689
    %v1691 = vadd.f32 %v1690, 1.0
    %v1692 = vrcp.pop %v1691
    %v1693 = vmul.f32 1.0, %v1692
    %v1694 = vadd.f32 %v1677, %v545
    %v1695 = vmul.f32 %v1686, %v1694
    %v1696 = vadd.f32 %v333, %v1695
    %v1697 = vtanh.pop %v1696
    %v1698 = vsub.f32 %v1536, %v1697
    %v1699 = vmul.f32 %v1693, %v1698
    %v1700 = vadd.f32 %v1697, %v1699
    %s1701 = scalar_lea.vmem [#allocation9], 56
    %1702 = vst [vmem:[%s1701] sm:$0xff] %v1700
    %1703 = vst [vmem:[#allocation2] sm:$0xff] %v1700
    // Predicated region
    $region38: #{tpu_custom_call.1} parent=1 // pred_check
      _
    $region39: #{tpu_custom_call.1} parent=1 // pred_check_branch
      %1705 = sbr.rel (0) target = $region41
    $region40: #{tpu_custom_call.1} parent=1 // pred_region
      %s1707 = ssub.s32 1024, 1024
      %1708 = vsyncadd [#allocation5], %s1707
      %s1709 = sshll.u32 [#allocation9], 4
      %s1710 = int_to_ptr.vmem [resolvable:$true] %s1709
      %1715 = dma.vmem_to_hbm [thread:$0]  %s1710, 1024, %s5, [#allocation5], 128, 128, 8
    $region41: #{tpu_custom_call.1} parent=1 // pred_fallthru
      _
    // Predicated region
    $region42: #{tpu_custom_call.1} parent=1 // pred_check
      _
    $region43: #{tpu_custom_call.1} parent=1 // pred_check_branch
      %1717 = sbr.rel (0) target = $region45
    $region44: #{tpu_custom_call.1} parent=1 // pred_region
      %1718 = dma.done [#allocation5], 1024
    $region45: #{tpu_custom_call.1} parent=1 // pred_fallthru
      _
    %1719 = vsyncpa [#allocation4], 1
    %1720 = vsyncpa [#allocation7], 1
    %1721 = vsyncpa [#allocation5], 1

</llo_original>
